<compile_context>
chip_gen: v6e
topology: v6e:2x2x1
jax: 0.10.0
libtpu: 0.0.40
codegen_flags: <defaults>
</compile_context>

<pallas_src>
import math
import jax
import jax.numpy as jnp
from jax import lax
from jax.experimental import pallas as pl
from jax.experimental.pallas import tpu as pltpu

B_J0 = 0.01   # baseline threshold
BETA = 1.8    # adaptation strength (isAdapt=1)
DT = 1.0      # (R_m = dt = 1 constant-folded inside the kernel)


def make_rnn_s_kernel(s, bb, c, h1, h2, H, out_dim, out_pad):
    def kernel(x_ref,
               wdf_ref, wdb_ref, wr_ref, bias_ref, a_ref, ro_ref,
               w3f_ref, w3b_ref, b3_ref, a3_ref,
               pred_ref,
               fwp_ref, bwp_ref):
        # ---- hoist all parameters / loop-invariant derived values ------------
        wdf = wdf_ref[...]            # (c, H) bf16 : [Wdf | 0]
        wdb = wdb_ref[...]            # (c, H) bf16 : [0 | Wdb]
        wr = wr_ref[...]              # (H, H) bf16 : diag(Wrf, Wrb)
        bias = bias_ref[...]          # (1, H) f32  : [bdf+brf | bdb+brb]
        a = a_ref[...]                # (1, H) f32  : [alpha_f | alpha_b]
        ro = ro_ref[...]              # (1, H) f32  : [rho_f   | rho_b]
        one_m_a = 1.0 - a
        beta_one_m_ro = BETA * (1.0 - ro)
        w3f = w3f_ref[...]            # (H, out_pad) bf16, fw rows only
        w3b = w3b_ref[...]            # (H, out_pad) bf16, bw rows only
        b3 = b3_ref[...]              # (1, out_pad) f32
        a3 = a3_ref[...]              # (1, out_pad) f32
        one_m_a3 = 1.0 - a3

        # ---- pass 1: frame loop, 5 fused ALIF sub-steps per frame ------------
        def frame(g, carry):
            mem, sp, bs = carry                      # all (bb, H) f32; bs = beta*b
            x_fw = x_ref[g]                          # (bb, c) bf16, constant over frame
            # python floor-div indexing: -l//5 -> idx 0 at l==0, s-g at sub-step 0,
            # s-1-g at sub-steps 1..4
            bw_t0 = jnp.where(g == 0, 0, s - g)
            bw_t1 = s - 1 - g
            x_bw0 = x_ref[bw_t0]
            x_bw1 = x_ref[bw_t1]

            # feedforward contributions, computed once per frame (bf16 x bf16 -> f32)
            dff_fw = jnp.dot(x_fw, wdf, preferred_element_type=jnp.float32)
            dff_0 = dff_fw + jnp.dot(x_bw0, wdb, preferred_element_type=jnp.float32) + bias
            dff_1 = dff_fw + jnp.dot(x_bw1, wdb, preferred_element_type=jnp.float32) + bias

            acc = jnp.zeros((bb, H), jnp.float32)
            for j in range(5):                       # static unroll of the 5 sub-steps
                dff = dff_0 if j == 0 else dff_1
                d = dff + jnp.dot(sp.astype(jnp.bfloat16), wr,
                                  preferred_element_type=jnp.float32)
                bs = ro * bs + beta_one_m_ro * sp    # beta * (rho*b + (1-rho)*spike)
                thr = B_J0 + bs
                mem = mem * a + one_m_a * d - thr * sp
                sp = (mem - thr > 0.0).astype(jnp.float32)
                acc = acc + sp

            # per-frame spike mean -> readout partials (no per-sub-step history)
            mean = (acc * 0.2).astype(jnp.bfloat16)  # (bb, H)
            fwp_ref[g] = jnp.dot(mean, w3f, preferred_element_type=jnp.float32)
            # bw spikes are consumed reversed (bw_spikes.insert(0, ...)) -> store reversed
            bwp_ref[s - 1 - g] = jnp.dot(mean, w3b, preferred_element_type=jnp.float32)
            return (mem, sp, bs)

        init = (jnp.zeros((bb, H), jnp.float32),
                jnp.zeros((bb, H), jnp.float32),
                jnp.full((bb, H), BETA * B_J0, jnp.float32))
        lax.fori_loop(0, s, frame, init)

        # ---- pass 2: leaky readout + log_softmax over the real out_dim lanes ---
        lane = lax.broadcasted_iota(jnp.int32, (bb, out_pad), 1)
        valid = lane < out_dim

        def readout(f, mem3):
            d3 = fwp_ref[f] + bwp_ref[f] + b3
            mem3 = mem3 * a3 + one_m_a3 * d3
            masked = jnp.where(valid, mem3, -1e30)   # exclude padded lanes
            m = jnp.max(masked, axis=-1, keepdims=True)
            lse = m + jnp.log(jnp.sum(jnp.exp(masked - m), axis=-1, keepdims=True))
            pred_ref[f] = mem3 - lse                 # lane-dense (bb, 128) store
            return mem3

        lax.fori_loop(0, s, readout, jnp.zeros((bb, out_pad), jnp.float32))

    return kernel


def rnn_s_forward(x, params, batch_block=None):
    """x: (batch, seq, feat) float32  ->  predictions (seq, batch, out_dim)."""
    b, s, c = x.shape
    h1 = params["wdf"].shape[1]
    h2 = params["wdb"].shape[1]
    H = h1 + h2
    out_dim = params["w3f"].shape[1]
    out_pad = ((out_dim + 127) // 128) * 128
    f32, bf16 = jnp.float32, jnp.bfloat16

    # (seq, batch, feat) layout, batch padded to a multiple of 8 sublanes
    BB = max(8, ((b + 7) // 8) * 8)
    x_t = jnp.transpose(x.astype(f32), (1, 0, 2)).astype(bf16)
    if BB != b:
        x_t = jnp.pad(x_t, ((0, 0), (0, BB - b), (0, 0)))

    # batch grid block: split across the 2 TensorCores (v7x megacore) when big enough
    if batch_block is None:
        batch_block = BB // 2 if (BB % 32 == 0) else BB
    bb = batch_block
    nb = BB // bb

    z = lambda r, cc: jnp.zeros((r, cc), f32)
    # fused feedforward weights: outputs land directly in the (b, h1+h2) state
    wd_f = jnp.concatenate([params["wdf"], z(c, h2)], axis=1).astype(bf16)      # (c, H)
    wd_b = jnp.concatenate([z(c, h1), params["wdb"]], axis=1).astype(bf16)      # (c, H)
    # block-diagonal recurrent weight
    wr = jnp.concatenate(
        [jnp.concatenate([params["wrf"], z(h1, h2)], axis=1),
         jnp.concatenate([z(h2, h1), params["wrb"]], axis=1)], axis=0).astype(bf16)  # (H, H)
    bias = jnp.concatenate([params["bdf"] + params["brf"],
                            params["bdb"] + params["brb"]], axis=1).astype(f32)      # (1, H)
    a = jnp.concatenate([params["af"], params["ab"]], axis=1).astype(f32)             # (1, H)
    ro = jnp.concatenate([params["rof"], params["rob"]], axis=1).astype(f32)          # (1, H)

    # readout weights, zero-padded to a lane-dense (H, out_pad) layout
    po = out_pad - out_dim
    w3f = jnp.concatenate([params["w3f"], z(h1, po)], axis=1)
    w3f = jnp.concatenate([w3f, z(h2, out_pad)], axis=0).astype(bf16)                 # (H, out_pad)
    w3b = jnp.concatenate([params["w3b"], z(h2, po)], axis=1)
    w3b = jnp.concatenate([z(h1, out_pad), w3b], axis=0).astype(bf16)                 # (H, out_pad)
    b3 = jnp.concatenate([params["b3"], z(1, po)], axis=1).astype(f32)                # (1, out_pad)
    a3 = jnp.concatenate([params["a3"], z(1, po)], axis=1).astype(f32)                # (1, out_pad)

    args = (x_t, wd_f, wd_b, wr, bias, a, ro, w3f, w3b, b3, a3)

    rep = lambda shape: pl.BlockSpec(shape, lambda i: (0, 0))   # replicated weights
    in_specs = [
        pl.BlockSpec((s, bb, c), lambda i: (0, i, 0)),          # x, tiled over batch
        rep((c, H)), rep((c, H)), rep((H, H)),
        rep((1, H)), rep((1, H)), rep((1, H)),
        rep((H, out_pad)), rep((H, out_pad)), rep((1, out_pad)), rep((1, out_pad)),
    ]
    out_specs = pl.BlockSpec((s, bb, out_pad), lambda i: (0, i, 0))

    # explicit VMEM budget: inputs + output block + 2 readout-partial scratch, x4 headroom
    bytes_needed = (x_t.size * x_t.dtype.itemsize
                    + sum(w.size * w.dtype.itemsize for w in args[1:])
                    + 3 * s * bb * out_pad * 4)
    vmem_limit = int(min(48 * 2**20, max(16 * 2**20, 4 * bytes_needed)))

    # TODO(synk): for very long sequences on v7x (64 MiB VMEM), keep x in HBM
    # (memory_space=pl.ANY) and double-buffer a per-frame DMA inside the frame loop.
    kernel = make_rnn_s_kernel(s, bb, c, h1, h2, H, out_dim, out_pad)
    pred = pl.pallas_call(
        kernel,
        grid=(nb,),
        out_shape=jax.ShapeDtypeStruct((s, BB, out_pad), jnp.float32),
        in_specs=in_specs,
        out_specs=out_specs,
        scratch_shapes=[pltpu.VMEM((s, bb, out_pad), jnp.float32),   # fw readout partials
                        pltpu.VMEM((s, bb, out_pad), jnp.float32)],  # bw readout partials (reversed)
        compiler_params=pltpu.CompilerParams(
            dimension_semantics=("parallel",),
            vmem_limit_bytes=vmem_limit),
    )(*args)
    return pred[:, :b, :out_dim]


# ---------------- deterministic parameter initialization -------------------
def _linear(kw, kb, fan_in, fan_out):
    bound = 1.0 / math.sqrt(fan_in)
    w = jax.random.uniform(kw, (fan_in, fan_out), jnp.float32, -bound, bound)
    b = jax.random.uniform(kb, (1, fan_out), jnp.float32, -bound, bound)
    return w, b


def _multi_normal(key, n, means, stds):
    g = n // len(means)
    keys = jax.random.split(key, len(means))
    parts = []
    for i, (m, sd) in enumerate(zip(means, stds)):
        size = g if i < len(means) - 1 else n - g * (len(means) - 1)
        parts.append(m + sd * jax.random.normal(keys[i], (size,), jnp.float32))
    return jnp.concatenate(parts)


def init_params(key, c, h1, h2, out_dim):
    ks = jax.random.split(key, 16)
    wdf, bdf = _linear(ks[0], ks[1], c, h1)
    wrf, brf = _linear(ks[2], ks[3], h1, h1)
    wdb, bdb = _linear(ks[4], ks[5], c, h2)
    wrb, brb = _linear(ks[6], ks[7], h2, h2)
    w3, b3 = _linear(ks[8], ks[9], h1 + h2, out_dim)

    tau_m_f = _multi_normal(ks[10], h1, [20, 20, 20, 20], [1, 5, 5, 5])
    tau_adp_f = _multi_normal(ks[11], h1, [200, 200, 250, 200], [5, 50, 100, 50])
    tau_m_b = _multi_normal(ks[12], h2, [20, 20, 20, 20], [5, 5, 5, 5])
    tau_adp_b = _multi_normal(ks[13], h2, [200, 200, 150, 200], [5, 50, 30, 10])
    tau_m_3 = 3.0 + 1.0 * jax.random.normal(ks[14], (out_dim,), jnp.float32)

    return {
        "wdf": wdf, "bdf": bdf, "wrf": wrf, "brf": brf,
        "af": jnp.exp(-DT / tau_m_f)[None, :], "rof": jnp.exp(-DT / tau_adp_f)[None, :],
        "wdb": wdb, "bdb": bdb, "wrb": wrb, "brb": brb,
        "ab": jnp.exp(-DT / tau_m_b)[None, :], "rob": jnp.exp(-DT / tau_adp_b)[None, :],
        "w3f": w3[:h1, :], "w3b": w3[h1:, :], "b3": b3,
        "a3": jnp.exp(-DT / tau_m_3)[None, :],
    }


if __name__ == "__main__":
    # small shapes consistent with the module: input feat = 39 (TIMIT fbanks),
    # hidden fw/bw reduced 256 -> 32, output_dim -> 8, batch=2, seq=4.
    batch, seq, feat = 2, 4, 39
    h1 = h2 = 32
    out_dim = 8

    key = jax.random.PRNGKey(0)
    kx, kp = jax.random.split(key)
    x = jax.random.normal(kx, (batch, seq, feat), jnp.float32)
    params = init_params(kp, feat, h1, h2, out_dim)

    preds = rnn_s_forward(x, params)
    preds = jax.block_until_ready(preds)

    assert preds.shape == (seq, batch, out_dim)
    # log_softmax rows must exponentiate-sum to 1
    assert bool(jnp.allclose(jnp.sum(jnp.exp(preds), axis=-1), 1.0, atol=1e-4))
    # TODO(synk): training branch (NLLLoss over labels) not implemented; the
    # reference forward with labels=None returns loss == 0.
    print("KERNEL_OK")
</pallas_src>

<mosaic_0001>
module attributes {stable_mosaic.version = 11 : i64} {
  func.func @kernel(%arg0: i32, %arg1: memref<4x8x39xbf16, #tpu.memory_space<vmem>>, %arg2: memref<39x64xbf16, #tpu.memory_space<vmem>>, %arg3: memref<39x64xbf16, #tpu.memory_space<vmem>>, %arg4: memref<64x64xbf16, #tpu.memory_space<vmem>>, %arg5: memref<1x64xf32, #tpu.memory_space<vmem>>, %arg6: memref<1x64xf32, #tpu.memory_space<vmem>>, %arg7: memref<1x64xf32, #tpu.memory_space<vmem>>, %arg8: memref<64x128xbf16, #tpu.memory_space<vmem>>, %arg9: memref<64x128xbf16, #tpu.memory_space<vmem>>, %arg10: memref<1x128xf32, #tpu.memory_space<vmem>>, %arg11: memref<1x128xf32, #tpu.memory_space<vmem>>, %arg12: memref<4x8x128xf32, #tpu.memory_space<vmem>>, %arg13: memref<4x8x128xf32, #tpu.memory_space<vmem>>, %arg14: memref<4x8x128xf32, #tpu.memory_space<vmem>>) attributes {dimension_semantics = [#tpu.dimension_semantics<parallel>], iteration_bounds = array<i64: 1>, scalar_prefetch = 0 : i64, scratch_operands = 2 : i64, tpu.core_type = #tpu.core_type<tc>, window_params = [{transform_indices = @transform_0, window_bounds = array<i64: 4, 8, 39>}, {pipeline_mode = #tpu.pipeline_mode<synchronous>, transform_indices = @transform_1, window_bounds = array<i64: 39, 64>}, {pipeline_mode = #tpu.pipeline_mode<synchronous>, transform_indices = @transform_2, window_bounds = array<i64: 39, 64>}, {pipeline_mode = #tpu.pipeline_mode<synchronous>, transform_indices = @transform_3, window_bounds = array<i64: 64, 64>}, {pipeline_mode = #tpu.pipeline_mode<synchronous>, transform_indices = @transform_4, window_bounds = array<i64: 1, 64>}, {pipeline_mode = #tpu.pipeline_mode<synchronous>, transform_indices = @transform_5, window_bounds = array<i64: 1, 64>}, {pipeline_mode = #tpu.pipeline_mode<synchronous>, transform_indices = @transform_6, window_bounds = array<i64: 1, 64>}, {pipeline_mode = #tpu.pipeline_mode<synchronous>, transform_indices = @transform_7, window_bounds = array<i64: 64, 128>}, {pipeline_mode = #tpu.pipeline_mode<synchronous>, transform_indices = @transform_8, window_bounds = array<i64: 64, 128>}, {pipeline_mode = #tpu.pipeline_mode<synchronous>, transform_indices = @transform_9, window_bounds = array<i64: 1, 128>}, {pipeline_mode = #tpu.pipeline_mode<synchronous>, transform_indices = @transform_10, window_bounds = array<i64: 1, 128>}, {transform_indices = @transform_11, window_bounds = array<i64: 4, 8, 128>}]} {
    %c0 = arith.constant 0 : index
    %c0_0 = arith.constant 0 : index
    %0 = vector.load %arg2[%c0, %c0_0] : memref<39x64xbf16, #tpu.memory_space<vmem>>, vector<39x64xbf16>
    %c0_1 = arith.constant 0 : index
    %c0_2 = arith.constant 0 : index
    %1 = vector.load %arg3[%c0_1, %c0_2] : memref<39x64xbf16, #tpu.memory_space<vmem>>, vector<39x64xbf16>
    %c0_3 = arith.constant 0 : index
    %c0_4 = arith.constant 0 : index
    %2 = vector.load %arg4[%c0_3, %c0_4] : memref<64x64xbf16, #tpu.memory_space<vmem>>, vector<64x64xbf16>
    %c0_5 = arith.constant 0 : index
    %c0_6 = arith.constant 0 : index
    %3 = vector.load %arg5[%c0_5, %c0_6] : memref<1x64xf32, #tpu.memory_space<vmem>>, vector<1x64xf32>
    %c0_7 = arith.constant 0 : index
    %c0_8 = arith.constant 0 : index
    %4 = vector.load %arg6[%c0_7, %c0_8] : memref<1x64xf32, #tpu.memory_space<vmem>>, vector<1x64xf32>
    %c0_9 = arith.constant 0 : index
    %c0_10 = arith.constant 0 : index
    %5 = vector.load %arg7[%c0_9, %c0_10] : memref<1x64xf32, #tpu.memory_space<vmem>>, vector<1x64xf32>
    %cst = arith.constant 1.000000e+00 : f32
    %6 = vector.broadcast %cst : f32 to vector<1x64xf32>
    %7 = arith.subf %6, %4 : vector<1x64xf32>
    %cst_11 = arith.constant 1.000000e+00 : f32
    %8 = vector.broadcast %cst_11 : f32 to vector<1x64xf32>
    %9 = arith.subf %8, %5 : vector<1x64xf32>
    %cst_12 = arith.constant 1.800000e+00 : f32
    %10 = vector.broadcast %cst_12 : f32 to vector<1x64xf32>
    %11 = arith.mulf %10, %9 : vector<1x64xf32>
    %c0_13 = arith.constant 0 : index
    %c0_14 = arith.constant 0 : index
    %12 = vector.load %arg8[%c0_13, %c0_14] : memref<64x128xbf16, #tpu.memory_space<vmem>>, vector<64x128xbf16>
    %c0_15 = arith.constant 0 : index
    %c0_16 = arith.constant 0 : index
    %13 = vector.load %arg9[%c0_15, %c0_16] : memref<64x128xbf16, #tpu.memory_space<vmem>>, vector<64x128xbf16>
    %c0_17 = arith.constant 0 : index
    %c0_18 = arith.constant 0 : index
    %14 = vector.load %arg10[%c0_17, %c0_18] : memref<1x128xf32, #tpu.memory_space<vmem>>, vector<1x128xf32>
    %c0_19 = arith.constant 0 : index
    %c0_20 = arith.constant 0 : index
    %15 = vector.load %arg11[%c0_19, %c0_20] : memref<1x128xf32, #tpu.memory_space<vmem>>, vector<1x128xf32>
    %cst_21 = arith.constant 1.000000e+00 : f32
    %16 = vector.broadcast %cst_21 : f32 to vector<1x128xf32>
    %17 = arith.subf %16, %15 : vector<1x128xf32>
    %cst_22 = arith.constant 0.000000e+00 : f32
    %18 = vector.broadcast %cst_22 : f32 to vector<8x64xf32>
    %cst_23 = arith.constant 0.000000e+00 : f32
    %19 = vector.broadcast %cst_23 : f32 to vector<8x64xf32>
    %cst_24 = arith.constant 1.800000e-02 : f32
    %20 = vector.broadcast %cst_24 : f32 to vector<8x64xf32>
    %c0_i32 = arith.constant 0 : i32
    %c4_i32 = arith.constant 4 : i32
    %21 = arith.addi %c0_i32, %c4_i32 : i32
    %c1_i32 = arith.constant 1 : i32
    %22:3 = scf.for %arg15 = %c0_i32 to %21 step %c1_i32 iter_args(%arg16 = %18, %arg17 = %19, %arg18 = %20) -> (vector<8x64xf32>, vector<8x64xf32>, vector<8x64xf32>)  : i32 {
      %29 = arith.index_cast %arg15 : i32 to index
      %c0_31 = arith.constant 0 : index
      %c0_32 = arith.constant 0 : index
      %30 = vector.load %arg1[%29, %c0_31, %c0_32] : memref<4x8x39xbf16, #tpu.memory_space<vmem>>, vector<1x8x39xbf16>
      %31 = vector.shape_cast %30 : vector<1x8x39xbf16> to vector<8x39xbf16>
      %c0_i32_33 = arith.constant 0 : i32
      %32 = arith.cmpi eq, %arg15, %c0_i32_33 : i32
      %c4_i32_34 = arith.constant 4 : i32
      %33 = arith.subi %c4_i32_34, %arg15 : i32
      %c0_i32_35 = arith.constant 0 : i32
      %34 = arith.select %32, %c0_i32_35, %33 : i32
      %c3_i32 = arith.constant 3 : i32
      %35 = arith.subi %c3_i32, %arg15 : i32
      %36 = arith.index_cast %34 : i32 to index
      %c0_36 = arith.constant 0 : index
      %c0_37 = arith.constant 0 : index
      %37 = vector.load %arg1[%36, %c0_36, %c0_37] : memref<4x8x39xbf16, #tpu.memory_space<vmem>>, vector<1x8x39xbf16>
      %38 = vector.shape_cast %37 : vector<1x8x39xbf16> to vector<8x39xbf16>
      %39 = arith.index_cast %35 : i32 to index
      %c0_38 = arith.constant 0 : index
      %c0_39 = arith.constant 0 : index
      %40 = vector.load %arg1[%39, %c0_38, %c0_39] : memref<4x8x39xbf16, #tpu.memory_space<vmem>>, vector<1x8x39xbf16>
      %41 = vector.shape_cast %40 : vector<1x8x39xbf16> to vector<8x39xbf16>
      %cst_40 = arith.constant dense<0.000000e+00> : vector<8x64xf32>
      %42 = tpu.matmul %31, %0, %cst_40 {dimension_numbers = #tpu.dot_dimension_numbers<[1], [0], [0], [1], [0, 0, 1, 1], [], []>} : vector<8x39xbf16>, vector<39x64xbf16>, vector<8x64xf32> -> vector<8x64xf32>
      %cst_41 = arith.constant dense<0.000000e+00> : vector<8x64xf32>
      %43 = tpu.matmul %38, %1, %cst_41 {dimension_numbers = #tpu.dot_dimension_numbers<[1], [0], [0], [1], [0, 0, 1, 1], [], []>} : vector<8x39xbf16>, vector<39x64xbf16>, vector<8x64xf32> -> vector<8x64xf32>
      %44 = arith.addf %42, %43 : vector<8x64xf32>
      %45 = vector.broadcast %3 : vector<1x64xf32> to vector<8x64xf32>
      %46 = arith.addf %44, %45 : vector<8x64xf32>
      %cst_42 = arith.constant dense<0.000000e+00> : vector<8x64xf32>
      %47 = tpu.matmul %41, %1, %cst_42 {dimension_numbers = #tpu.dot_dimension_numbers<[1], [0], [0], [1], [0, 0, 1, 1], [], []>} : vector<8x39xbf16>, vector<39x64xbf16>, vector<8x64xf32> -> vector<8x64xf32>
      %48 = arith.addf %42, %47 : vector<8x64xf32>
      %49 = vector.broadcast %3 : vector<1x64xf32> to vector<8x64xf32>
      %50 = arith.addf %48, %49 : vector<8x64xf32>
      %cst_43 = arith.constant 0.000000e+00 : f32
      %51 = vector.broadcast %cst_43 : f32 to vector<8x64xf32>
      %52 = arith.truncf %arg17 : vector<8x64xf32> to vector<8x64xbf16>
      %cst_44 = arith.constant dense<0.000000e+00> : vector<8x64xf32>
      %53 = tpu.matmul %52, %2, %cst_44 {dimension_numbers = #tpu.dot_dimension_numbers<[1], [0], [0], [1], [0, 0, 1, 1], [], []>} : vector<8x64xbf16>, vector<64x64xbf16>, vector<8x64xf32> -> vector<8x64xf32>
      %54 = arith.addf %46, %53 : vector<8x64xf32>
      %55 = vector.broadcast %5 : vector<1x64xf32> to vector<8x64xf32>
      %56 = arith.mulf %55, %arg18 : vector<8x64xf32>
      %57 = vector.broadcast %11 : vector<1x64xf32> to vector<8x64xf32>
      %58 = arith.mulf %57, %arg17 : vector<8x64xf32>
      %59 = arith.addf %56, %58 : vector<8x64xf32>
      %cst_45 = arith.constant 0.00999999977 : f32
      %60 = vector.broadcast %cst_45 : f32 to vector<8x64xf32>
      %61 = arith.addf %60, %59 : vector<8x64xf32>
      %62 = vector.broadcast %4 : vector<1x64xf32> to vector<8x64xf32>
      %63 = arith.mulf %arg16, %62 : vector<8x64xf32>
      %64 = vector.broadcast %7 : vector<1x64xf32> to vector<8x64xf32>
      %65 = arith.mulf %64, %54 : vector<8x64xf32>
      %66 = arith.addf %63, %65 : vector<8x64xf32>
      %67 = arith.mulf %61, %arg17 : vector<8x64xf32>
      %68 = arith.subf %66, %67 : vector<8x64xf32>
      %69 = arith.subf %68, %61 : vector<8x64xf32>
      %cst_46 = arith.constant 0.000000e+00 : f32
      %70 = vector.broadcast %cst_46 : f32 to vector<8x64xf32>
      %71 = arith.cmpf ogt, %69, %70 : vector<8x64xf32>
      %72 = arith.extui %71 : vector<8x64xi1> to vector<8x64xi32>
      %73 = arith.sitofp %72 : vector<8x64xi32> to vector<8x64xf32>
      %74 = arith.addf %51, %73 : vector<8x64xf32>
      %75 = arith.truncf %73 : vector<8x64xf32> to vector<8x64xbf16>
      %cst_47 = arith.constant dense<0.000000e+00> : vector<8x64xf32>
      %76 = tpu.matmul %75, %2, %cst_47 {dimension_numbers = #tpu.dot_dimension_numbers<[1], [0], [0], [1], [0, 0, 1, 1], [], []>} : vector<8x64xbf16>, vector<64x64xbf16>, vector<8x64xf32> -> vector<8x64xf32>
      %77 = arith.addf %50, %76 : vector<8x64xf32>
      %78 = vector.broadcast %5 : vector<1x64xf32> to vector<8x64xf32>
      %79 = arith.mulf %78, %59 : vector<8x64xf32>
      %80 = vector.broadcast %11 : vector<1x64xf32> to vector<8x64xf32>
      %81 = arith.mulf %80, %73 : vector<8x64xf32>
      %82 = arith.addf %79, %81 : vector<8x64xf32>
      %cst_48 = arith.constant 0.00999999977 : f32
      %83 = vector.broadcast %cst_48 : f32 to vector<8x64xf32>
      %84 = arith.addf %83, %82 : vector<8x64xf32>
      %85 = vector.broadcast %4 : vector<1x64xf32> to vector<8x64xf32>
      %86 = arith.mulf %68, %85 : vector<8x64xf32>
      %87 = vector.broadcast %7 : vector<1x64xf32> to vector<8x64xf32>
      %88 = arith.mulf %87, %77 : vector<8x64xf32>
      %89 = arith.addf %86, %88 : vector<8x64xf32>
      %90 = arith.mulf %84, %73 : vector<8x64xf32>
      %91 = arith.subf %89, %90 : vector<8x64xf32>
      %92 = arith.subf %91, %84 : vector<8x64xf32>
      %cst_49 = arith.constant 0.000000e+00 : f32
      %93 = vector.broadcast %cst_49 : f32 to vector<8x64xf32>
      %94 = arith.cmpf ogt, %92, %93 : vector<8x64xf32>
      %95 = arith.extui %94 : vector<8x64xi1> to vector<8x64xi32>
      %96 = arith.sitofp %95 : vector<8x64xi32> to vector<8x64xf32>
      %97 = arith.addf %74, %96 : vector<8x64xf32>
      %98 = arith.truncf %96 : vector<8x64xf32> to vector<8x64xbf16>
      %cst_50 = arith.constant dense<0.000000e+00> : vector<8x64xf32>
      %99 = tpu.matmul %98, %2, %cst_50 {dimension_numbers = #tpu.dot_dimension_numbers<[1], [0], [0], [1], [0, 0, 1, 1], [], []>} : vector<8x64xbf16>, vector<64x64xbf16>, vector<8x64xf32> -> vector<8x64xf32>
      %100 = arith.addf %50, %99 : vector<8x64xf32>
      %101 = vector.broadcast %5 : vector<1x64xf32> to vector<8x64xf32>
      %102 = arith.mulf %101, %82 : vector<8x64xf32>
      %103 = vector.broadcast %11 : vector<1x64xf32> to vector<8x64xf32>
      %104 = arith.mulf %103, %96 : vector<8x64xf32>
      %105 = arith.addf %102, %104 : vector<8x64xf32>
      %cst_51 = arith.constant 0.00999999977 : f32
      %106 = vector.broadcast %cst_51 : f32 to vector<8x64xf32>
      %107 = arith.addf %106, %105 : vector<8x64xf32>
      %108 = vector.broadcast %4 : vector<1x64xf32> to vector<8x64xf32>
      %109 = arith.mulf %91, %108 : vector<8x64xf32>
      %110 = vector.broadcast %7 : vector<1x64xf32> to vector<8x64xf32>
      %111 = arith.mulf %110, %100 : vector<8x64xf32>
      %112 = arith.addf %109, %111 : vector<8x64xf32>
      %113 = arith.mulf %107, %96 : vector<8x64xf32>
      %114 = arith.subf %112, %113 : vector<8x64xf32>
      %115 = arith.subf %114, %107 : vector<8x64xf32>
      %cst_52 = arith.constant 0.000000e+00 : f32
      %116 = vector.broadcast %cst_52 : f32 to vector<8x64xf32>
      %117 = arith.cmpf ogt, %115, %116 : vector<8x64xf32>
      %118 = arith.extui %117 : vector<8x64xi1> to vector<8x64xi32>
      %119 = arith.sitofp %118 : vector<8x64xi32> to vector<8x64xf32>
      %120 = arith.addf %97, %119 : vector<8x64xf32>
      %121 = arith.truncf %119 : vector<8x64xf32> to vector<8x64xbf16>
      %cst_53 = arith.constant dense<0.000000e+00> : vector<8x64xf32>
      %122 = tpu.matmul %121, %2, %cst_53 {dimension_numbers = #tpu.dot_dimension_numbers<[1], [0], [0], [1], [0, 0, 1, 1], [], []>} : vector<8x64xbf16>, vector<64x64xbf16>, vector<8x64xf32> -> vector<8x64xf32>
      %123 = arith.addf %50, %122 : vector<8x64xf32>
      %124 = vector.broadcast %5 : vector<1x64xf32> to vector<8x64xf32>
      %125 = arith.mulf %124, %105 : vector<8x64xf32>
      %126 = vector.broadcast %11 : vector<1x64xf32> to vector<8x64xf32>
      %127 = arith.mulf %126, %119 : vector<8x64xf32>
      %128 = arith.addf %125, %127 : vector<8x64xf32>
      %cst_54 = arith.constant 0.00999999977 : f32
      %129 = vector.broadcast %cst_54 : f32 to vector<8x64xf32>
      %130 = arith.addf %129, %128 : vector<8x64xf32>
      %131 = vector.broadcast %4 : vector<1x64xf32> to vector<8x64xf32>
      %132 = arith.mulf %114, %131 : vector<8x64xf32>
      %133 = vector.broadcast %7 : vector<1x64xf32> to vector<8x64xf32>
      %134 = arith.mulf %133, %123 : vector<8x64xf32>
      %135 = arith.addf %132, %134 : vector<8x64xf32>
      %136 = arith.mulf %130, %119 : vector<8x64xf32>
      %137 = arith.subf %135, %136 : vector<8x64xf32>
      %138 = arith.subf %137, %130 : vector<8x64xf32>
      %cst_55 = arith.constant 0.000000e+00 : f32
      %139 = vector.broadcast %cst_55 : f32 to vector<8x64xf32>
      %140 = arith.cmpf ogt, %138, %139 : vector<8x64xf32>
      %141 = arith.extui %140 : vector<8x64xi1> to vector<8x64xi32>
      %142 = arith.sitofp %141 : vector<8x64xi32> to vector<8x64xf32>
      %143 = arith.addf %120, %142 : vector<8x64xf32>
      %144 = arith.truncf %142 : vector<8x64xf32> to vector<8x64xbf16>
      %cst_56 = arith.constant dense<0.000000e+00> : vector<8x64xf32>
      %145 = tpu.matmul %144, %2, %cst_56 {dimension_numbers = #tpu.dot_dimension_numbers<[1], [0], [0], [1], [0, 0, 1, 1], [], []>} : vector<8x64xbf16>, vector<64x64xbf16>, vector<8x64xf32> -> vector<8x64xf32>
      %146 = arith.addf %50, %145 : vector<8x64xf32>
      %147 = vector.broadcast %5 : vector<1x64xf32> to vector<8x64xf32>
      %148 = arith.mulf %147, %128 : vector<8x64xf32>
      %149 = vector.broadcast %11 : vector<1x64xf32> to vector<8x64xf32>
      %150 = arith.mulf %149, %142 : vector<8x64xf32>
      %151 = arith.addf %148, %150 : vector<8x64xf32>
      %cst_57 = arith.constant 0.00999999977 : f32
      %152 = vector.broadcast %cst_57 : f32 to vector<8x64xf32>
      %153 = arith.addf %152, %151 : vector<8x64xf32>
      %154 = vector.broadcast %4 : vector<1x64xf32> to vector<8x64xf32>
      %155 = arith.mulf %137, %154 : vector<8x64xf32>
      %156 = vector.broadcast %7 : vector<1x64xf32> to vector<8x64xf32>
      %157 = arith.mulf %156, %146 : vector<8x64xf32>
      %158 = arith.addf %155, %157 : vector<8x64xf32>
      %159 = arith.mulf %153, %142 : vector<8x64xf32>
      %160 = arith.subf %158, %159 : vector<8x64xf32>
      %161 = arith.subf %160, %153 : vector<8x64xf32>
      %cst_58 = arith.constant 0.000000e+00 : f32
      %162 = vector.broadcast %cst_58 : f32 to vector<8x64xf32>
      %163 = arith.cmpf ogt, %161, %162 : vector<8x64xf32>
      %164 = arith.extui %163 : vector<8x64xi1> to vector<8x64xi32>
      %165 = arith.sitofp %164 : vector<8x64xi32> to vector<8x64xf32>
      %166 = arith.addf %143, %165 : vector<8x64xf32>
      %cst_59 = arith.constant 2.000000e-01 : f32
      %167 = vector.broadcast %cst_59 : f32 to vector<8x64xf32>
      %168 = arith.mulf %166, %167 : vector<8x64xf32>
      %169 = arith.truncf %168 : vector<8x64xf32> to vector<8x64xbf16>
      %cst_60 = arith.constant dense<0.000000e+00> : vector<8x128xf32>
      %170 = tpu.matmul %169, %12, %cst_60 {dimension_numbers = #tpu.dot_dimension_numbers<[1], [0], [0], [1], [0, 0, 1, 1], [], []>} : vector<8x64xbf16>, vector<64x128xbf16>, vector<8x128xf32> -> vector<8x128xf32>
      %171 = arith.index_cast %arg15 : i32 to index
      %c0_61 = arith.constant 0 : index
      %c0_62 = arith.constant 0 : index
      %172 = vector.load %arg13[%171, %c0_61, %c0_62] : memref<4x8x128xf32, #tpu.memory_space<vmem>>, vector<1x8x128xf32>
      %173 = vector.shape_cast %172 : vector<1x8x128xf32> to vector<8x128xf32>
      %174 = vector.shape_cast %170 : vector<8x128xf32> to vector<1x8x128xf32>
      tpu.vector_store %arg13[%171, %c0_61, %c0_62], %174 {strides = array<i32>} : memref<4x8x128xf32, #tpu.memory_space<vmem>>, vector<1x8x128xf32>,
      %cst_63 = arith.constant dense<0.000000e+00> : vector<8x128xf32>
      %175 = tpu.matmul %169, %13, %cst_63 {dimension_numbers = #tpu.dot_dimension_numbers<[1], [0], [0], [1], [0, 0, 1, 1], [], []>} : vector<8x64xbf16>, vector<64x128xbf16>, vector<8x128xf32> -> vector<8x128xf32>
      %c3_i32_64 = arith.constant 3 : i32
      %176 = arith.subi %c3_i32_64, %arg15 : i32
      %177 = arith.index_cast %176 : i32 to index
      %c0_65 = arith.constant 0 : index
      %c0_66 = arith.constant 0 : index
      %178 = vector.load %arg14[%177, %c0_65, %c0_66] : memref<4x8x128xf32, #tpu.memory_space<vmem>>, vector<1x8x128xf32>
      %179 = vector.shape_cast %178 : vector<1x8x128xf32> to vector<8x128xf32>
      %180 = vector.shape_cast %175 : vector<8x128xf32> to vector<1x8x128xf32>
      tpu.vector_store %arg14[%177, %c0_65, %c0_66], %180 {strides = array<i32>} : memref<4x8x128xf32, #tpu.memory_space<vmem>>, vector<1x8x128xf32>,
      scf.yield %160, %165, %151 : vector<8x64xf32>, vector<8x64xf32>, vector<8x64xf32>
    }
    %c4_i32_25 = arith.constant 4 : i32
    %23 = tpu.iota {dimensions = array<i32: 1>} : vector<8x128xi32>
    %c8_i32 = arith.constant 8 : i32
    %24 = vector.broadcast %c8_i32 : i32 to vector<8x128xi32>
    %25 = arith.cmpi slt, %23, %24 : vector<8x128xi32>
    %cst_26 = arith.constant 0.000000e+00 : f32
    %26 = vector.broadcast %cst_26 : f32 to vector<8x128xf32>
    %c0_i32_27 = arith.constant 0 : i32
    %c4_i32_28 = arith.constant 4 : i32
    %27 = arith.addi %c0_i32_27, %c4_i32_28 : i32
    %c1_i32_29 = arith.constant 1 : i32
    %28 = scf.for %arg15 = %c0_i32_27 to %27 step %c1_i32_29 iter_args(%arg16 = %26) -> (vector<8x128xf32>)  : i32 {
      %29 = arith.index_cast %arg15 : i32 to index
      %c0_31 = arith.constant 0 : index
      %c0_32 = arith.constant 0 : index
      %30 = vector.load %arg13[%29, %c0_31, %c0_32] : memref<4x8x128xf32, #tpu.memory_space<vmem>>, vector<1x8x128xf32>
      %31 = vector.shape_cast %30 : vector<1x8x128xf32> to vector<8x128xf32>
      %32 = arith.index_cast %arg15 : i32 to index
      %c0_33 = arith.constant 0 : index
      %c0_34 = arith.constant 0 : index
      %33 = vector.load %arg14[%32, %c0_33, %c0_34] : memref<4x8x128xf32, #tpu.memory_space<vmem>>, vector<1x8x128xf32>
      %34 = vector.shape_cast %33 : vector<1x8x128xf32> to vector<8x128xf32>
      %35 = arith.addf %31, %34 : vector<8x128xf32>
      %36 = vector.broadcast %14 : vector<1x128xf32> to vector<8x128xf32>
      %37 = arith.addf %35, %36 : vector<8x128xf32>
      %38 = vector.broadcast %15 : vector<1x128xf32> to vector<8x128xf32>
      %39 = arith.mulf %arg16, %38 : vector<8x128xf32>
      %40 = vector.broadcast %17 : vector<1x128xf32> to vector<8x128xf32>
      %41 = arith.mulf %40, %37 : vector<8x128xf32>
      %42 = arith.addf %39, %41 : vector<8x128xf32>
      %cst_35 = arith.constant -1.000000e+30 : f32
      %43 = vector.broadcast %cst_35 : f32 to vector<8x128xf32>
      %44 = arith.select %25, %42, %43 : vector<8x128xi1>, vector<8x128xf32>
      %cst_36 = arith.constant dense<0xFF800000> : vector<8xf32>
      %45 = vector.multi_reduction <maximumf>, %44, %cst_36 [1] : vector<8x128xf32> to vector<8xf32>
      %46 = vector.shape_cast %45 : vector<8xf32> to vector<8x1xf32>
      %47 = vector.broadcast %46 : vector<8x1xf32> to vector<8x128xf32>
      %48 = arith.subf %44, %47 : vector<8x128xf32>
      %49 = math.exp %48 : vector<8x128xf32>
      %cst_37 = arith.constant dense<0.000000e+00> : vector<8xf32>
      %50 = vector.multi_reduction <add>, %49, %cst_37 [1] : vector<8x128xf32> to vector<8xf32>
      %51 = vector.shape_cast %50 : vector<8xf32> to vector<8x1xf32>
      %52 = math.log %51 : vector<8x1xf32>
      %53 = arith.addf %46, %52 : vector<8x1xf32>
      %54 = vector.broadcast %53 : vector<8x1xf32> to vector<8x128xf32>
      %55 = arith.subf %42, %54 : vector<8x128xf32>
      %56 = arith.index_cast %arg15 : i32 to index
      %c0_38 = arith.constant 0 : index
      %c0_39 = arith.constant 0 : index
      %57 = vector.load %arg12[%56, %c0_38, %c0_39] : memref<4x8x128xf32, #tpu.memory_space<vmem>>, vector<1x8x128xf32>
      %58 = vector.shape_cast %57 : vector<1x8x128xf32> to vector<8x128xf32>
      %59 = vector.shape_cast %55 : vector<8x128xf32> to vector<1x8x128xf32>
      tpu.vector_store %arg12[%56, %c0_38, %c0_39], %59 {strides = array<i32>} : memref<4x8x128xf32, #tpu.memory_space<vmem>>, vector<1x8x128xf32>,
      scf.yield %42 : vector<8x128xf32>
    }
    %c4_i32_30 = arith.constant 4 : i32
    return
  }
  func.func @transform_0(%arg0: i32) -> (i32, i32, i32) {
    %c0_i32 = arith.constant 0 : i32
    %c0_i32_0 = arith.constant 0 : i32
    %c0_i32_1 = arith.constant 0 : i32
    return %c0_i32, %arg0, %c0_i32_0 : i32, i32, i32
  }
  func.func @transform_1(%arg0: i32) -> (i32, i32) {
    %c0_i32 = arith.constant 0 : i32
    %c0_i32_0 = arith.constant 0 : i32
    %c0_i32_1 = arith.constant 0 : i32
    return %c0_i32, %c0_i32_0 : i32, i32
  }
  func.func @transform_2(%arg0: i32) -> (i32, i32) {
    %c0_i32 = arith.constant 0 : i32
    %c0_i32_0 = arith.constant 0 : i32
    %c0_i32_1 = arith.constant 0 : i32
    return %c0_i32, %c0_i32_0 : i32, i32
  }
  func.func @transform_3(%arg0: i32) -> (i32, i32) {
    %c0_i32 = arith.constant 0 : i32
    %c0_i32_0 = arith.constant 0 : i32
    %c0_i32_1 = arith.constant 0 : i32
    return %c0_i32, %c0_i32_0 : i32, i32
  }
  func.func @transform_4(%arg0: i32) -> (i32, i32) {
    %c0_i32 = arith.constant 0 : i32
    %c0_i32_0 = arith.constant 0 : i32
    %c0_i32_1 = arith.constant 0 : i32
    return %c0_i32, %c0_i32_0 : i32, i32
  }
  func.func @transform_5(%arg0: i32) -> (i32, i32) {
    %c0_i32 = arith.constant 0 : i32
    %c0_i32_0 = arith.constant 0 : i32
    %c0_i32_1 = arith.constant 0 : i32
    return %c0_i32, %c0_i32_0 : i32, i32
  }
  func.func @transform_6(%arg0: i32) -> (i32, i32) {
    %c0_i32 = arith.constant 0 : i32
    %c0_i32_0 = arith.constant 0 : i32
    %c0_i32_1 = arith.constant 0 : i32
    return %c0_i32, %c0_i32_0 : i32, i32
  }
  func.func @transform_7(%arg0: i32) -> (i32, i32) {
    %c0_i32 = arith.constant 0 : i32
    %c0_i32_0 = arith.constant 0 : i32
    %c0_i32_1 = arith.constant 0 : i32
    return %c0_i32, %c0_i32_0 : i32, i32
  }
  func.func @transform_8(%arg0: i32) -> (i32, i32) {
    %c0_i32 = arith.constant 0 : i32
    %c0_i32_0 = arith.constant 0 : i32
    %c0_i32_1 = arith.constant 0 : i32
    return %c0_i32, %c0_i32_0 : i32, i32
  }
  func.func @transform_9(%arg0: i32) -> (i32, i32) {
    %c0_i32 = arith.constant 0 : i32
    %c0_i32_0 = arith.constant 0 : i32
    %c0_i32_1 = arith.constant 0 : i32
    return %c0_i32, %c0_i32_0 : i32, i32
  }
  func.func @transform_10(%arg0: i32) -> (i32, i32) {
    %c0_i32 = arith.constant 0 : i32
    %c0_i32_0 = arith.constant 0 : i32
    %c0_i32_1 = arith.constant 0 : i32
    return %c0_i32, %c0_i32_0 : i32, i32
  }
  func.func @transform_11(%arg0: i32) -> (i32, i32, i32) {
    %c0_i32 = arith.constant 0 : i32
    %c0_i32_0 = arith.constant 0 : i32
    %c0_i32_1 = arith.constant 0 : i32
    return %c0_i32, %arg0, %c0_i32_0 : i32, i32, i32
  }
}

</mosaic_0001>

<llo_original>
// kernel: tpu_custom_call.1
$region0: #{tpu_custom_call.1}
  #allocation0 [shape = 'u32[]', space=smem, size = 0x4, offset = 0x4, fixed_abs, tag = 'smem constant byte address 0x4 - core index']
  #allocation1 [shape = 'u32[144,128]{1,0:T(1,128)}', space=vmem, size = 0x12000, scoped, tag = 'internal scratch']
  #allocation2 [shape = 'f32[4,8,128]{2,1,0:T(8,128)}', space=vmem, size = 0x4000, scoped, tag = 'scratch operand']
  #allocation3 [shape = 'f32[4,8,128]{2,1,0:T(8,128)}', space=vmem, size = 0x4000, scoped, tag = 'scratch operand']
  %s0 = inlined_call_operand.hbm [shape: bf16[4,8,39], index: 0, kind: input, shape index: {}]
  %s1 = inlined_call_operand.hbm [shape: bf16[39,64], index: 1, kind: input, shape index: {}]
  %s2 = inlined_call_operand.hbm [shape: bf16[39,64], index: 2, kind: input, shape index: {}]
  %s3 = inlined_call_operand.hbm [shape: bf16[64,64], index: 3, kind: input, shape index: {}]
  %s4 = inlined_call_operand.vmem [shape: f32[1,64], index: 4, kind: input, shape index: {}]
  %s5 = inlined_call_operand.vmem [shape: f32[1,64], index: 5, kind: input, shape index: {}]
  %s6 = inlined_call_operand.vmem [shape: f32[1,64], index: 6, kind: input, shape index: {}]
  %s7 = inlined_call_operand.hbm [shape: bf16[64,128], index: 7, kind: input, shape index: {}]
  %s8 = inlined_call_operand.hbm [shape: bf16[64,128], index: 8, kind: input, shape index: {}]
  %s9 = inlined_call_operand.vmem [shape: f32[1,128], index: 9, kind: input, shape index: {}]
  %s10 = inlined_call_operand.vmem [shape: f32[1,128], index: 10, kind: input, shape index: {}]
  %s11 = inlined_call_operand.hbm [shape: f32[4,8,128], index: 11, kind: output, shape index: {}]
  %s12 = sld [smem:[#allocation0]]
  $region92: #{tpu_custom_call.1} parent=0
    _
  %s14 = ssub.s32 1, %s12
  %s15 = scalar_select 0, %s14, %s12
  $region1: #{tpu_custom_call.1} parent=0
    #allocation4 [shape = 'u8[8192]{0}', space=vmem, size = 0x2000, scoped, tag = 'input window, operand 0, single buffered']
    #allocation5 [shape = 's32[1]{0}', space=sflag, size = 0x4, scoped, tag = 'scoped memory for tpu_custom_call.1']
    #allocation6 [shape = 's32[1]{0}', space=sflag, size = 0x4, scoped, tag = 'scoped memory for tpu_custom_call.1']
    #allocation7 [shape = 'u8[10240]{0}', space=vmem, size = 0x2800, scoped, tag = 'input window, operand 1, single buffered']
    #allocation8 [shape = 's32[1]{0}', space=sflag, size = 0x4, scoped, tag = 'scoped memory for tpu_custom_call.1']
    #allocation9 [shape = 'u8[10240]{0}', space=vmem, size = 0x2800, scoped, tag = 'input window, operand 2, single buffered']
    #allocation10 [shape = 'u8[16384]{0}', space=vmem, size = 0x4000, scoped, tag = 'input window, operand 3, single buffered']
    #allocation11 [shape = 's32[1]{0}', space=sflag, size = 0x4, scoped, tag = 'scoped memory for tpu_custom_call.1']
    #allocation12 [shape = 'u8[16384]{0}', space=vmem, size = 0x4000, scoped, tag = 'input window, operand 7, single buffered']
    #allocation13 [shape = 'u8[16384]{0}', space=vmem, size = 0x4000, scoped, tag = 'input window, operand 8, single buffered']
    #allocation14 [shape = 's32[1]{0}', space=sflag, size = 0x4, scoped, tag = 'scoped memory for tpu_custom_call.1']
    #allocation15 [shape = 'u8[16384]{0}', space=vmem, size = 0x4000, scoped, tag = 'output window, operand 0, single buffered']
    %16 = vsyncpa [#allocation5], 0
    %17 = vsyncpa [#allocation8], 0
    %18 = vsyncpa [#allocation11], 0
    %19 = vsyncpa [#allocation14], 0
    %20 = vsyncpa [#allocation6], 0
    // Predicated region
    $region2: #{tpu_custom_call.1} parent=1 // pred_check
      _
    $region3: #{tpu_custom_call.1} parent=1 // pred_check_branch
      %22 = sbr.rel (0) target = $region5
    $region4: #{tpu_custom_call.1} parent=1 // pred_region
      %s24 = ssub.s32 256, 256
      %25 = vsyncadd [#allocation5], %s24
      %s26 = sshll.u32 [#allocation4], 4
      %s27 = int_to_ptr.vmem [resolvable:$true] %s26
      %32 = dma.hbm_to_vmem [thread:$0]  %s0, 256, %s27, [#allocation5], 64, 64, 4
    $region5: #{tpu_custom_call.1} parent=1 // pred_fallthru
      _
    // Predicated region
    $region6: #{tpu_custom_call.1} parent=1 // pred_check
      _
    $region7: #{tpu_custom_call.1} parent=1 // pred_check_branch
      %34 = sbr.rel (0) target = $region9
    $region8: #{tpu_custom_call.1} parent=1 // pred_region
      %s36 = ssub.s32 320, 320
      %37 = vsyncadd [#allocation8], %s36
      %s38 = sshll.u32 [#allocation7], 4
      %s39 = int_to_ptr.vmem [resolvable:$true] %s38
      %44 = dma.hbm_to_vmem [thread:$0]  %s1, 320, %s39, [#allocation8], 64, 64, 4
    $region9: #{tpu_custom_call.1} parent=1 // pred_fallthru
      _
    // Predicated region
    $region10: #{tpu_custom_call.1} parent=1 // pred_check
      _
    $region11: #{tpu_custom_call.1} parent=1 // pred_check_branch
      %46 = sbr.rel (0) target = $region13
    $region12: #{tpu_custom_call.1} parent=1 // pred_region
      %s48 = ssub.s32 320, 320
      %49 = vsyncadd [#allocation8], %s48
      %s50 = sshll.u32 [#allocation9], 4
      %s51 = int_to_ptr.vmem [resolvable:$true] %s50
      %56 = dma.hbm_to_vmem [thread:$0]  %s2, 320, %s51, [#allocation8], 64, 64, 4
    $region13: #{tpu_custom_call.1} parent=1 // pred_fallthru
      _
    // Predicated region
    $region14: #{tpu_custom_call.1} parent=1 // pred_check
      _
    $region15: #{tpu_custom_call.1} parent=1 // pred_check_branch
      %58 = sbr.rel (0) target = $region17
    $region16: #{tpu_custom_call.1} parent=1 // pred_region
      %s60 = ssub.s32 512, 512
      %61 = vsyncadd [#allocation11], %s60
      %s62 = sshll.u32 [#allocation10], 4
      %s63 = int_to_ptr.vmem [resolvable:$true] %s62
      %68 = dma.hbm_to_vmem [thread:$0]  %s3, 512, %s63, [#allocation11], 64, 64, 4
    $region17: #{tpu_custom_call.1} parent=1 // pred_fallthru
      _
    // Predicated region
    $region18: #{tpu_custom_call.1} parent=1 // pred_check
      _
    $region19: #{tpu_custom_call.1} parent=1 // pred_check_branch
      %70 = sbr.rel (0) target = $region21
    $region20: #{tpu_custom_call.1} parent=1 // pred_region
      _
    $region21: #{tpu_custom_call.1} parent=1 // pred_fallthru
      _
    // Predicated region
    $region22: #{tpu_custom_call.1} parent=1 // pred_check
      _
    $region23: #{tpu_custom_call.1} parent=1 // pred_check_branch
      %72 = sbr.rel (0) target = $region25
    $region24: #{tpu_custom_call.1} parent=1 // pred_region
      _
    $region25: #{tpu_custom_call.1} parent=1 // pred_fallthru
      _
    // Predicated region
    $region26: #{tpu_custom_call.1} parent=1 // pred_check
      _
    $region27: #{tpu_custom_call.1} parent=1 // pred_check_branch
      %74 = sbr.rel (0) target = $region29
    $region28: #{tpu_custom_call.1} parent=1 // pred_region
      _
    $region29: #{tpu_custom_call.1} parent=1 // pred_fallthru
      _
    // Predicated region
    $region30: #{tpu_custom_call.1} parent=1 // pred_check
      _
    $region31: #{tpu_custom_call.1} parent=1 // pred_check_branch
      %76 = sbr.rel (0) target = $region33
    $region32: #{tpu_custom_call.1} parent=1 // pred_region
      %s78 = ssub.s32 512, 512
      %79 = vsyncadd [#allocation11], %s78
      %s80 = sshll.u32 [#allocation12], 4
      %s81 = int_to_ptr.vmem [resolvable:$true] %s80
      %86 = dma.hbm_to_vmem [thread:$0]  %s7, 512, %s81, [#allocation11], 64, 64, 4
    $region33: #{tpu_custom_call.1} parent=1 // pred_fallthru
      _
    // Predicated region
    $region34: #{tpu_custom_call.1} parent=1 // pred_check
      _
    $region35: #{tpu_custom_call.1} parent=1 // pred_check_branch
      %88 = sbr.rel (0) target = $region37
    $region36: #{tpu_custom_call.1} parent=1 // pred_region
      %s90 = ssub.s32 512, 512
      %91 = vsyncadd [#allocation14], %s90
      %s92 = sshll.u32 [#allocation13], 4
      %s93 = int_to_ptr.vmem [resolvable:$true] %s92
      %98 = dma.hbm_to_vmem [thread:$0]  %s8, 512, %s93, [#allocation14], 64, 64, 4
    $region37: #{tpu_custom_call.1} parent=1 // pred_fallthru
      _
    // Predicated region
    $region38: #{tpu_custom_call.1} parent=1 // pred_check
      _
    $region39: #{tpu_custom_call.1} parent=1 // pred_check_branch
      %100 = sbr.rel (0) target = $region41
    $region40: #{tpu_custom_call.1} parent=1 // pred_region
      _
    $region41: #{tpu_custom_call.1} parent=1 // pred_fallthru
      _
    // Predicated region
    $region42: #{tpu_custom_call.1} parent=1 // pred_check
      _
    $region43: #{tpu_custom_call.1} parent=1 // pred_check_branch
      %102 = sbr.rel (0) target = $region45
    $region44: #{tpu_custom_call.1} parent=1 // pred_region
      _
    $region45: #{tpu_custom_call.1} parent=1 // pred_fallthru
      _
    // Predicated region
    $region46: #{tpu_custom_call.1} parent=1 // pred_check
      _
    $region47: #{tpu_custom_call.1} parent=1 // pred_check_branch
      %104 = sbr.rel (0) target = $region49
    $region48: #{tpu_custom_call.1} parent=1 // pred_region
      %105 = dma.done [#allocation5], 256
    $region49: #{tpu_custom_call.1} parent=1 // pred_fallthru
      _
    // Predicated region
    $region50: #{tpu_custom_call.1} parent=1 // pred_check
      _
    $region51: #{tpu_custom_call.1} parent=1 // pred_check_branch
      %107 = sbr.rel (0) target = $region53
    $region52: #{tpu_custom_call.1} parent=1 // pred_region
      %108 = dma.done [#allocation8], 320
    $region53: #{tpu_custom_call.1} parent=1 // pred_fallthru
      _
    // Predicated region
    $region54: #{tpu_custom_call.1} parent=1 // pred_check
      _
    $region55: #{tpu_custom_call.1} parent=1 // pred_check_branch
      %110 = sbr.rel (0) target = $region57
    $region56: #{tpu_custom_call.1} parent=1 // pred_region
      %111 = dma.done [#allocation8], 320
    $region57: #{tpu_custom_call.1} parent=1 // pred_fallthru
      _
    // Predicated region
    $region58: #{tpu_custom_call.1} parent=1 // pred_check
      _
    $region59: #{tpu_custom_call.1} parent=1 // pred_check_branch
      %113 = sbr.rel (0) target = $region61
    $region60: #{tpu_custom_call.1} parent=1 // pred_region
      %114 = dma.done [#allocation11], 512
    $region61: #{tpu_custom_call.1} parent=1 // pred_fallthru
      _
    // Predicated region
    $region62: #{tpu_custom_call.1} parent=1 // pred_check
      _
    $region63: #{tpu_custom_call.1} parent=1 // pred_check_branch
      %116 = sbr.rel (0) target = $region65
    $region64: #{tpu_custom_call.1} parent=1 // pred_region
      %117 = dma.done [#allocation11], 512
    $region65: #{tpu_custom_call.1} parent=1 // pred_fallthru
      _
    // Predicated region
    $region66: #{tpu_custom_call.1} parent=1 // pred_check
      _
    $region67: #{tpu_custom_call.1} parent=1 // pred_check_branch
      %119 = sbr.rel (0) target = $region69
    $region68: #{tpu_custom_call.1} parent=1 // pred_region
      %120 = dma.done [#allocation14], 512
    $region69: #{tpu_custom_call.1} parent=1 // pred_fallthru
      _
    %v122 = vld [vmem:[#allocation7] sm:$0xf]
    %v123 = vld [vmem:[#allocation7 + $0x4] sm:$0xf]
    %v124 = vld [vmem:[#allocation7 + $0x8] sm:$0xf]
    %v125 = vld [vmem:[#allocation7 + $0xc] sm:$0xf]
    %v126 = vld [vmem:[#allocation7 + $0x10] sm:$0xf]
    %v127 = vld [vmem:[#allocation9] sm:$0xf]
    %v128 = vld [vmem:[#allocation9 + $0x4] sm:$0xf]
    %v129 = vld [vmem:[#allocation9 + $0x8] sm:$0xf]
    %v130 = vld [vmem:[#allocation9 + $0xc] sm:$0xf]
    %v131 = vld [vmem:[#allocation9 + $0x10] sm:$0xf]
    %v132 = vld [vmem:[#allocation10] sm:$0xf]
    %v133 = vld [vmem:[#allocation10 + $0x4] sm:$0xf]
    %v134 = vld [vmem:[#allocation10 + $0x8] sm:$0xf]
    %v135 = vld [vmem:[#allocation10 + $0xc] sm:$0xf]
    %v136 = vld [vmem:[#allocation10 + $0x10] sm:$0xf]
    %v137 = vld [vmem:[#allocation10 + $0x14] sm:$0xf]
    %v138 = vld [vmem:[#allocation10 + $0x18] sm:$0xf]
    %v139 = vld [vmem:[#allocation10 + $0x1c] sm:$0xf]
    %v140 = vld [vmem:[%s4] sm:$0x1]
    %v141 = vld [vmem:[%s5] sm:$0x1]
    %v142 = vld [vmem:[%s6] sm:$0x1]
    %v143 = vsub.f32 1.0, %v141
    %v144 = vsub.f32 1.0, %v142
    %v145 = vmul.f32 %v144, 1.8
    %v146 = vld [vmem:[#allocation12] sm:$0xf]
    %v147 = vld [vmem:[#allocation12 + $0x4] sm:$0xf]
    %v148 = vld [vmem:[#allocation12 + $0x8] sm:$0xf]
    %v149 = vld [vmem:[#allocation12 + $0xc] sm:$0xf]
    %v150 = vld [vmem:[#allocation12 + $0x10] sm:$0xf]
    %v151 = vld [vmem:[#allocation12 + $0x14] sm:$0xf]
    %v152 = vld [vmem:[#allocation12 + $0x18] sm:$0xf]
    %v153 = vld [vmem:[#allocation12 + $0x1c] sm:$0xf]
    %v154 = vld [vmem:[#allocation13] sm:$0xf]
    %v155 = vld [vmem:[#allocation13 + $0x4] sm:$0xf]
    %v156 = vld [vmem:[#allocation13 + $0x8] sm:$0xf]
    %v157 = vld [vmem:[#allocation13 + $0xc] sm:$0xf]
    %v158 = vld [vmem:[#allocation13 + $0x10] sm:$0xf]
    %v159 = vld [vmem:[#allocation13 + $0x14] sm:$0xf]
    %v160 = vld [vmem:[#allocation13 + $0x18] sm:$0xf]
    %v161 = vld [vmem:[#allocation13 + $0x1c] sm:$0xf]
    %v162 = vld [vmem:[%s9] sm:$0x1]
    %v163 = vld [vmem:[%s10] sm:$0x1]
    %v164 = vsub.f32 1.0, %v163
    loop: start=0, step=1, limit=4
    $region70: #{tpu_custom_call.1} parent=1 // loop_pre_header
      _
    $region71: #{tpu_custom_call.1} parent=1 // loop_header
      %s166 = sphi 0, %s170
      %p167 = scmp.ge.s32.totalorder %s166, 4
      %v171 = vphi 0.0, %v705
      %v172 = vphi 0.0, %v709
      %v173 = vphi 0.018, %v699
    $region72: #{tpu_custom_call.1} parent=1 // loop_header_branch
      %169 = sbr.rel (%p167) target = $region76
    $region73: #{tpu_custom_call.1} parent=1 // loop_body
      %s174 = smul.addr %s166, 4
      %s175 = scalar_lea.vmem [#allocation4], %s174
      %v176 = vld [vmem:[%s175] sm:$0xf]
      %p177 = scmp.eq.s32.totalorder %s166, 0
      %s178 = ssub.s32 4, %s166
      %s179 = scalar_select %p177, 0, %s178
      %s180 = ssub.s32 3, %s166
      %s181 = smul.addr %s179, 4
      %s182 = scalar_lea.vmem [#allocation4], %s181
      %v183 = vld [vmem:[%s182] sm:$0xf]
      %s184 = smul.addr %s180, 4
      %s185 = scalar_lea.vmem [#allocation4], %s184
      %v186 = vld [vmem:[%s185] sm:$0xf]
      %v192 = vunpack.c.l.b16 %v122
      %v193 = vunpack.c.l.b16 %v123
      %v194 = vunpack.c.l.b16 %v124
      %v195 = vunpack.c.l.b16 %v125
      %v196 = vunpack.c.l.b16 %v126
      %v197 = vpack.c.b16 %v193, %v192
      %v198 = vpack.c.b16 %v195, %v194
      %v199 = vpack.c.b16 %v196, %v196
      %vm202 = vcmask 318464
      %v204 = vsel %vm202, %v176, 0
      %vm206 = vcmask 1042432
      %vm207 = vcmask 1043456
      %v208 = vsel %vm206, 4294967295, 65535
      %v209 = vsel %vm207, %v208, 0
      %v211 = vand.u32 %v199, %v209
      %213 = vmatprep.subr.bf16.mxu0 0
      %214 = vmatpush1.bf16.msra.mxu0 0
      %215 = vmatprep.subr.bf16.mxu0 0
      %216 = vmatpush1.bf16.msra.mxu0 0
      %217 = vmatprep.subr.bf16.mxu0 0
      %218 = vmatpush1.bf16.msra.mxu0 0
      %219 = vmatprep.subr.bf16.mxu0 0
      %220 = vmatpush1.bf16.msra.mxu0 0
      %221 = vmatprep.subr.bf16.mxu0 0
      %222 = vmatpush1.bf16.msra.mxu0 0
      %223 = vmatprep.subr.bf16.mxu0 0
      %224 = vmatpush1.bf16.msra.mxu0 %v211
      %225 = vmatprep.subr.bf16.mxu0 0
      %226 = vmatpush1.bf16.msra.mxu0 %v198
      %227 = vmatprep.subr.bf16.mxu0 0
      %228 = vmatpush1.bf16.msra.mxu0 %v197
      %229 = vmatprep.subr.bf16.mxu0 0
      %230 = vmatpush2.bf16.msra.mxu0 0
      %231 = vmatprep.subr.bf16.mxu0 0
      %232 = vmatpush2.bf16.msra.mxu0 0
      %233 = vmatprep.subr.bf16.mxu0 0
      %234 = vmatpush2.bf16.msra.mxu0 0
      %235 = vmatprep.subr.bf16.mxu0 0
      %236 = vmatpush2.bf16.msra.mxu0 0
      %237 = vmatprep.subr.bf16.mxu0 0
      %238 = vmatpush2.bf16.msra.mxu0 0
      %239 = vmatprep.subr.bf16.mxu0 0
      %240 = vmatpush2.bf16.msra.mxu0 0
      %241 = vmatprep.subr.bf16.mxu0 0
      %242 = vmatpush2.bf16.msra.mxu0 0
      %243 = vmatprep.subr.bf16.mxu0 0
      %244 = vmatpush2.bf16.msra.mxu0 0
      %245 = vmatprep.mubr.bf16.mxu0 0
      %246 = vmatmul.mubr.bf16.gmra.mxu0 %v204
      %v247 = vpop.f32.mrf.mxu0
      %v248 = vadd.f32 0.0, %v247
      %v249 = vpop.f32.mrf.mxu0
      %v250 = vpop.f32.mrf.mxu0
      %v251 = vpop.f32.mrf.mxu0
      %252 = vdwg.mxu0
      %v258 = vunpack.c.l.b16 %v127
      %v259 = vunpack.c.l.b16 %v128
      %v260 = vunpack.c.l.b16 %v129
      %v261 = vunpack.c.l.b16 %v130
      %v262 = vunpack.c.l.b16 %v131
      %v263 = vpack.c.b16 %v259, %v258
      %v264 = vpack.c.b16 %v261, %v260
      %v265 = vpack.c.b16 %v262, %v262
      %v269 = vsel %vm202, %v183, 0
      %v272 = vand.u32 %v265, %v209
      %274 = vmatprep.subr.bf16.mxu0 0
      %275 = vmatpush1.bf16.msra.mxu0 0
      %276 = vmatprep.subr.bf16.mxu0 0
      %277 = vmatpush1.bf16.msra.mxu0 0
      %278 = vmatprep.subr.bf16.mxu0 0
      %279 = vmatpush1.bf16.msra.mxu0 0
      %280 = vmatprep.subr.bf16.mxu0 0
      %281 = vmatpush1.bf16.msra.mxu0 0
      %282 = vmatprep.subr.bf16.mxu0 0
      %283 = vmatpush1.bf16.msra.mxu0 0
      %284 = vmatprep.subr.bf16.mxu0 0
      %285 = vmatpush1.bf16.msra.mxu0 %v272
      %286 = vmatprep.subr.bf16.mxu0 0
      %287 = vmatpush1.bf16.msra.mxu0 %v264
      %288 = vmatprep.subr.bf16.mxu0 0
      %289 = vmatpush1.bf16.msra.mxu0 %v263
      %290 = vmatprep.subr.bf16.mxu0 0
      %291 = vmatpush2.bf16.msra.mxu0 0
      %292 = vmatprep.subr.bf16.mxu0 0
      %293 = vmatpush2.bf16.msra.mxu0 0
      %294 = vmatprep.subr.bf16.mxu0 0
      %295 = vmatpush2.bf16.msra.mxu0 0
      %296 = vmatprep.subr.bf16.mxu0 0
      %297 = vmatpush2.bf16.msra.mxu0 0
      %298 = vmatprep.subr.bf16.mxu0 0
      %299 = vmatpush2.bf16.msra.mxu0 0
      %300 = vmatprep.subr.bf16.mxu0 0
      %301 = vmatpush2.bf16.msra.mxu0 0
      %302 = vmatprep.subr.bf16.mxu0 0
      %303 = vmatpush2.bf16.msra.mxu0 0
      %304 = vmatprep.subr.bf16.mxu0 0
      %305 = vmatpush2.bf16.msra.mxu0 0
      %306 = vmatprep.mubr.bf16.mxu0 0
      %307 = vmatmul.mubr.bf16.gmra.mxu0 %v269
      %v308 = vpop.f32.mrf.mxu0
      %v309 = vadd.f32 0.0, %v308
      %v310 = vpop.f32.mrf.mxu0
      %v311 = vpop.f32.mrf.mxu0
      %v312 = vpop.f32.mrf.mxu0
      %313 = vdwg.mxu0
      %v314 = vadd.f32 %v248, %v309
      %v316 = vlaneseq
      %v317 = vshrl.u32 %v316, 7
      %v318 = vsub.s32 0, %v317
      %v319 = vrot.slane %v140, %v318
      %v321 = vadd.f32 %v314, %v319
      %v323 = vsel %vm202, %v186, 0
      %325 = vmatprep.subr.bf16.mxu0 0
      %326 = vmatpush1.bf16.msra.mxu0 0
      %327 = vmatprep.subr.bf16.mxu0 0
      %328 = vmatpush1.bf16.msra.mxu0 0
      %329 = vmatprep.subr.bf16.mxu0 0
      %330 = vmatpush1.bf16.msra.mxu0 0
      %331 = vmatprep.subr.bf16.mxu0 0
      %332 = vmatpush1.bf16.msra.mxu0 0
      %333 = vmatprep.subr.bf16.mxu0 0
      %334 = vmatpush1.bf16.msra.mxu0 0
      %335 = vmatprep.subr.bf16.mxu0 0
      %336 = vmatpush1.bf16.msra.mxu0 %v272
      %337 = vmatprep.subr.bf16.mxu0 0
      %338 = vmatpush1.bf16.msra.mxu0 %v264
      %339 = vmatprep.subr.bf16.mxu0 0
      %340 = vmatpush1.bf16.msra.mxu0 %v263
      %341 = vmatprep.subr.bf16.mxu0 0
      %342 = vmatpush2.bf16.msra.mxu0 0
      %343 = vmatprep.subr.bf16.mxu0 0
      %344 = vmatpush2.bf16.msra.mxu0 0
      %345 = vmatprep.subr.bf16.mxu0 0
      %346 = vmatpush2.bf16.msra.mxu0 0
      %347 = vmatprep.subr.bf16.mxu0 0
      %348 = vmatpush2.bf16.msra.mxu0 0
      %349 = vmatprep.subr.bf16.mxu0 0
      %350 = vmatpush2.bf16.msra.mxu0 0
      %351 = vmatprep.subr.bf16.mxu0 0
      %352 = vmatpush2.bf16.msra.mxu0 0
      %353 = vmatprep.subr.bf16.mxu0 0
      %354 = vmatpush2.bf16.msra.mxu0 0
      %355 = vmatprep.subr.bf16.mxu0 0
      %356 = vmatpush2.bf16.msra.mxu0 0
      %357 = vmatprep.mubr.bf16.mxu0 0
      %358 = vmatmul.mubr.bf16.gmra.mxu0 %v323
      %v359 = vpop.f32.mrf.mxu0
      %v360 = vadd.f32 0.0, %v359
      %v361 = vpop.f32.mrf.mxu0
      %v362 = vpop.f32.mrf.mxu0
      %v363 = vpop.f32.mrf.mxu0
      %364 = vdwg.mxu0
      %v365 = vadd.f32 %v248, %v360
      %v366 = vadd.f32 %v365, %v319
      %v367 = vpack.c.bf16 %v172, %v172
      %v376 = vunpack.c.l.b16 %v132
      %v377 = vunpack.c.l.b16 %v133
      %v378 = vunpack.c.l.b16 %v134
      %v379 = vunpack.c.l.b16 %v135
      %v380 = vunpack.c.l.b16 %v136
      %v381 = vunpack.c.l.b16 %v137
      %v382 = vunpack.c.l.b16 %v138
      %v383 = vunpack.c.l.b16 %v139
      %v384 = vpack.c.b16 %v377, %v376
      %v385 = vpack.c.b16 %v379, %v378
      %v386 = vpack.c.b16 %v381, %v380
      %v387 = vpack.c.b16 %v383, %v382
      %vm392 = vcmask 523264
      %v394 = vsel %vm392, %v367, 0
      %396 = vmatprep.subr.bf16.mxu0 0
      %397 = vmatpush1.bf16.msra.mxu0 0
      %398 = vmatprep.subr.bf16.mxu0 0
      %399 = vmatpush1.bf16.msra.mxu0 0
      %400 = vmatprep.subr.bf16.mxu0 0
      %401 = vmatpush1.bf16.msra.mxu0 0
      %402 = vmatprep.subr.bf16.mxu0 0
      %403 = vmatpush1.bf16.msra.mxu0 0
      %404 = vmatprep.subr.bf16.mxu0 0
      %405 = vmatpush1.bf16.msra.mxu0 %v387
      %406 = vmatprep.subr.bf16.mxu0 0
      %407 = vmatpush1.bf16.msra.mxu0 %v386
      %408 = vmatprep.subr.bf16.mxu0 0
      %409 = vmatpush1.bf16.msra.mxu0 %v385
      %410 = vmatprep.subr.bf16.mxu0 0
      %411 = vmatpush1.bf16.msra.mxu0 %v384
      %412 = vmatprep.subr.bf16.mxu0 0
      %413 = vmatpush2.bf16.msra.mxu0 0
      %414 = vmatprep.subr.bf16.mxu0 0
      %415 = vmatpush2.bf16.msra.mxu0 0
      %416 = vmatprep.subr.bf16.mxu0 0
      %417 = vmatpush2.bf16.msra.mxu0 0
      %418 = vmatprep.subr.bf16.mxu0 0
      %419 = vmatpush2.bf16.msra.mxu0 0
      %420 = vmatprep.subr.bf16.mxu0 0
      %421 = vmatpush2.bf16.msra.mxu0 0
      %422 = vmatprep.subr.bf16.mxu0 0
      %423 = vmatpush2.bf16.msra.mxu0 0
      %424 = vmatprep.subr.bf16.mxu0 0
      %425 = vmatpush2.bf16.msra.mxu0 0
      %426 = vmatprep.subr.bf16.mxu0 0
      %427 = vmatpush2.bf16.msra.mxu0 0
      %428 = vmatprep.mubr.bf16.mxu0 0
      %429 = vmatmul.mubr.bf16.gmra.mxu0 %v394
      %v430 = vpop.f32.mrf.mxu0
      %v431 = vadd.f32 0.0, %v430
      %v432 = vpop.f32.mrf.mxu0
      %v433 = vpop.f32.mrf.mxu0
      %v434 = vpop.f32.mrf.mxu0
      %435 = vdwg.mxu0
      %v436 = vadd.f32 %v321, %v431
      %v438 = vlaneseq
      %v439 = vshrl.u32 %v438, 7
      %v440 = vsub.s32 0, %v439
      %v441 = vrot.slane %v142, %v440
      %v443 = vmul.f32 %v441, %v173
      %v445 = vlaneseq
      %v446 = vshrl.u32 %v445, 7
      %v447 = vsub.s32 0, %v446
      %v448 = vrot.slane %v145, %v447
      %v450 = vmul.f32 %v448, %v172
      %v451 = vadd.f32 %v443, %v450
      %v452 = vadd.f32 %v451, 0.01
      %v454 = vlaneseq
      %v455 = vshrl.u32 %v454, 7
      %v456 = vsub.s32 0, %v455
      %v457 = vrot.slane %v141, %v456
      %v459 = vmul.f32 %v171, %v457
      %v461 = vlaneseq
      %v462 = vshrl.u32 %v461, 7
      %v463 = vsub.s32 0, %v462
      %v464 = vrot.slane %v143, %v463
      %v466 = vmul.f32 %v464, %v436
      %v467 = vadd.f32 %v459, %v466
      %v468 = vmul.f32 %v452, %v172
      %v469 = vsub.f32 %v467, %v468
      %v470 = vsub.f32 %v469, %v452
      %vm471 = vcmp.gt.f32.partialorder %v470, 0.0
      %v472 = vsel %vm471, 1, 0
      %v473 = vcvt.s32.f32 %v472
      %v474 = vadd.f32 %v473, 0.0
      %v475 = vpack.c.bf16 %v473, %v473
      %v477 = vsel %vm392, %v475, 0
      %479 = vmatprep.subr.bf16.mxu0 0
      %480 = vmatpush1.bf16.msra.mxu0 0
      %481 = vmatprep.subr.bf16.mxu0 0
      %482 = vmatpush1.bf16.msra.mxu0 0
      %483 = vmatprep.subr.bf16.mxu0 0
      %484 = vmatpush1.bf16.msra.mxu0 0
      %485 = vmatprep.subr.bf16.mxu0 0
      %486 = vmatpush1.bf16.msra.mxu0 0
      %487 = vmatprep.subr.bf16.mxu0 0
      %488 = vmatpush1.bf16.msra.mxu0 %v387
      %489 = vmatprep.subr.bf16.mxu0 0
      %490 = vmatpush1.bf16.msra.mxu0 %v386
      %491 = vmatprep.subr.bf16.mxu0 0
      %492 = vmatpush1.bf16.msra.mxu0 %v385
      %493 = vmatprep.subr.bf16.mxu0 0
      %494 = vmatpush1.bf16.msra.mxu0 %v384
      %495 = vmatprep.subr.bf16.mxu0 0
      %496 = vmatpush2.bf16.msra.mxu0 0
      %497 = vmatprep.subr.bf16.mxu0 0
      %498 = vmatpush2.bf16.msra.mxu0 0
      %499 = vmatprep.subr.bf16.mxu0 0
      %500 = vmatpush2.bf16.msra.mxu0 0
      %501 = vmatprep.subr.bf16.mxu0 0
      %502 = vmatpush2.bf16.msra.mxu0 0
      %503 = vmatprep.subr.bf16.mxu0 0
      %504 = vmatpush2.bf16.msra.mxu0 0
      %505 = vmatprep.subr.bf16.mxu0 0
      %506 = vmatpush2.bf16.msra.mxu0 0
      %507 = vmatprep.subr.bf16.mxu0 0
      %508 = vmatpush2.bf16.msra.mxu0 0
      %509 = vmatprep.subr.bf16.mxu0 0
      %510 = vmatpush2.bf16.msra.mxu0 0
      %511 = vmatprep.mubr.bf16.mxu0 0
      %512 = vmatmul.mubr.bf16.gmra.mxu0 %v477
      %v513 = vpop.f32.mrf.mxu0
      %v514 = vadd.f32 0.0, %v513
      %v515 = vpop.f32.mrf.mxu0
      %v516 = vpop.f32.mrf.mxu0
      %v517 = vpop.f32.mrf.mxu0
      %518 = vdwg.mxu0
      %v519 = vadd.f32 %v366, %v514
      %v520 = vmul.f32 %v441, %v451
      %v521 = vmul.f32 %v448, %v473
      %v522 = vadd.f32 %v520, %v521
      %v523 = vadd.f32 %v522, 0.01
      %v524 = vmul.f32 %v469, %v457
      %v525 = vmul.f32 %v464, %v519
      %v526 = vadd.f32 %v524, %v525
      %v527 = vmul.f32 %v523, %v473
      %v528 = vsub.f32 %v526, %v527
      %v529 = vsub.f32 %v528, %v523
      %vm530 = vcmp.gt.f32.partialorder %v529, 0.0
      %v531 = vsel %vm530, 1, 0
      %v532 = vcvt.s32.f32 %v531
      %v533 = vadd.f32 %v474, %v532
      %v534 = vpack.c.bf16 %v532, %v532
      %v536 = vsel %vm392, %v534, 0
      %538 = vmatprep.subr.bf16.mxu0 0
      %539 = vmatpush1.bf16.msra.mxu0 0
      %540 = vmatprep.subr.bf16.mxu0 0
      %541 = vmatpush1.bf16.msra.mxu0 0
      %542 = vmatprep.subr.bf16.mxu0 0
      %543 = vmatpush1.bf16.msra.mxu0 0
      %544 = vmatprep.subr.bf16.mxu0 0
      %545 = vmatpush1.bf16.msra.mxu0 0
      %546 = vmatprep.subr.bf16.mxu0 0
      %547 = vmatpush1.bf16.msra.mxu0 %v387
      %548 = vmatprep.subr.bf16.mxu0 0
      %549 = vmatpush1.bf16.msra.mxu0 %v386
      %550 = vmatprep.subr.bf16.mxu0 0
      %551 = vmatpush1.bf16.msra.mxu0 %v385
      %552 = vmatprep.subr.bf16.mxu0 0
      %553 = vmatpush1.bf16.msra.mxu0 %v384
      %554 = vmatprep.subr.bf16.mxu0 0
      %555 = vmatpush2.bf16.msra.mxu0 0
      %556 = vmatprep.subr.bf16.mxu0 0
      %557 = vmatpush2.bf16.msra.mxu0 0
      %558 = vmatprep.subr.bf16.mxu0 0
      %559 = vmatpush2.bf16.msra.mxu0 0
      %560 = vmatprep.subr.bf16.mxu0 0
      %561 = vmatpush2.bf16.msra.mxu0 0
      %562 = vmatprep.subr.bf16.mxu0 0
      %563 = vmatpush2.bf16.msra.mxu0 0
      %564 = vmatprep.subr.bf16.mxu0 0
      %565 = vmatpush2.bf16.msra.mxu0 0
      %566 = vmatprep.subr.bf16.mxu0 0
      %567 = vmatpush2.bf16.msra.mxu0 0
      %568 = vmatprep.subr.bf16.mxu0 0
      %569 = vmatpush2.bf16.msra.mxu0 0
      %570 = vmatprep.mubr.bf16.mxu0 0
      %571 = vmatmul.mubr.bf16.gmra.mxu0 %v536
      %v572 = vpop.f32.mrf.mxu0
      %v573 = vadd.f32 0.0, %v572
      %v574 = vpop.f32.mrf.mxu0
      %v575 = vpop.f32.mrf.mxu0
      %v576 = vpop.f32.mrf.mxu0
      %577 = vdwg.mxu0
      %v578 = vadd.f32 %v366, %v573
      %v579 = vmul.f32 %v441, %v522
      %v580 = vmul.f32 %v448, %v532
      %v581 = vadd.f32 %v579, %v580
      %v582 = vadd.f32 %v581, 0.01
      %v583 = vmul.f32 %v528, %v457
      %v584 = vmul.f32 %v464, %v578
      %v585 = vadd.f32 %v583, %v584
      %v586 = vmul.f32 %v582, %v532
      %v587 = vsub.f32 %v585, %v586
      %v588 = vsub.f32 %v587, %v582
      %vm589 = vcmp.gt.f32.partialorder %v588, 0.0
      %v590 = vsel %vm589, 1, 0
      %v591 = vcvt.s32.f32 %v590
      %v592 = vadd.f32 %v533, %v591
      %v593 = vpack.c.bf16 %v591, %v591
      %v595 = vsel %vm392, %v593, 0
      %597 = vmatprep.subr.bf16.mxu0 0
      %598 = vmatpush1.bf16.msra.mxu0 0
      %599 = vmatprep.subr.bf16.mxu0 0
      %600 = vmatpush1.bf16.msra.mxu0 0
      %601 = vmatprep.subr.bf16.mxu0 0
      %602 = vmatpush1.bf16.msra.mxu0 0
      %603 = vmatprep.subr.bf16.mxu0 0
      %604 = vmatpush1.bf16.msra.mxu0 0
      %605 = vmatprep.subr.bf16.mxu0 0
      %606 = vmatpush1.bf16.msra.mxu0 %v387
      %607 = vmatprep.subr.bf16.mxu0 0
      %608 = vmatpush1.bf16.msra.mxu0 %v386
      %609 = vmatprep.subr.bf16.mxu0 0
      %610 = vmatpush1.bf16.msra.mxu0 %v385
      %611 = vmatprep.subr.bf16.mxu0 0
      %612 = vmatpush1.bf16.msra.mxu0 %v384
      %613 = vmatprep.subr.bf16.mxu0 0
      %614 = vmatpush2.bf16.msra.mxu0 0
      %615 = vmatprep.subr.bf16.mxu0 0
      %616 = vmatpush2.bf16.msra.mxu0 0
      %617 = vmatprep.subr.bf16.mxu0 0
      %618 = vmatpush2.bf16.msra.mxu0 0
      %619 = vmatprep.subr.bf16.mxu0 0
      %620 = vmatpush2.bf16.msra.mxu0 0
      %621 = vmatprep.subr.bf16.mxu0 0
      %622 = vmatpush2.bf16.msra.mxu0 0
      %623 = vmatprep.subr.bf16.mxu0 0
      %624 = vmatpush2.bf16.msra.mxu0 0
      %625 = vmatprep.subr.bf16.mxu0 0
      %626 = vmatpush2.bf16.msra.mxu0 0
      %627 = vmatprep.subr.bf16.mxu0 0
      %628 = vmatpush2.bf16.msra.mxu0 0
      %629 = vmatprep.mubr.bf16.mxu0 0
      %630 = vmatmul.mubr.bf16.gmra.mxu0 %v595
      %v631 = vpop.f32.mrf.mxu0
      %v632 = vadd.f32 0.0, %v631
      %v633 = vpop.f32.mrf.mxu0
      %v634 = vpop.f32.mrf.mxu0
      %v635 = vpop.f32.mrf.mxu0
      %636 = vdwg.mxu0
      %v637 = vadd.f32 %v366, %v632
      %v638 = vmul.f32 %v441, %v581
      %v639 = vmul.f32 %v448, %v591
      %v640 = vadd.f32 %v638, %v639
      %v641 = vadd.f32 %v640, 0.01
      %v642 = vmul.f32 %v587, %v457
      %v643 = vmul.f32 %v464, %v637
      %v644 = vadd.f32 %v642, %v643
      %v645 = vmul.f32 %v641, %v591
      %v646 = vsub.f32 %v644, %v645
      %v647 = vsub.f32 %v646, %v641
      %vm648 = vcmp.gt.f32.partialorder %v647, 0.0
      %v649 = vsel %vm648, 1, 0
      %v650 = vcvt.s32.f32 %v649
      %v651 = vadd.f32 %v592, %v650
      %v652 = vpack.c.bf16 %v650, %v650
      %v654 = vsel %vm392, %v652, 0
      %656 = vmatprep.subr.bf16.mxu0 0
      %657 = vmatpush1.bf16.msra.mxu0 0
      %658 = vmatprep.subr.bf16.mxu0 0
      %659 = vmatpush1.bf16.msra.mxu0 0
      %660 = vmatprep.subr.bf16.mxu0 0
      %661 = vmatpush1.bf16.msra.mxu0 0
      %662 = vmatprep.subr.bf16.mxu0 0
      %663 = vmatpush1.bf16.msra.mxu0 0
      %664 = vmatprep.subr.bf16.mxu0 0
      %665 = vmatpush1.bf16.msra.mxu0 %v387
      %666 = vmatprep.subr.bf16.mxu0 0
      %667 = vmatpush1.bf16.msra.mxu0 %v386
      %668 = vmatprep.subr.bf16.mxu0 0
      %669 = vmatpush1.bf16.msra.mxu0 %v385
      %670 = vmatprep.subr.bf16.mxu0 0
      %671 = vmatpush1.bf16.msra.mxu0 %v384
      %672 = vmatprep.subr.bf16.mxu0 0
      %673 = vmatpush2.bf16.msra.mxu0 0
      %674 = vmatprep.subr.bf16.mxu0 0
      %675 = vmatpush2.bf16.msra.mxu0 0
      %676 = vmatprep.subr.bf16.mxu0 0
      %677 = vmatpush2.bf16.msra.mxu0 0
      %678 = vmatprep.subr.bf16.mxu0 0
      %679 = vmatpush2.bf16.msra.mxu0 0
      %680 = vmatprep.subr.bf16.mxu0 0
      %681 = vmatpush2.bf16.msra.mxu0 0
      %682 = vmatprep.subr.bf16.mxu0 0
      %683 = vmatpush2.bf16.msra.mxu0 0
      %684 = vmatprep.subr.bf16.mxu0 0
      %685 = vmatpush2.bf16.msra.mxu0 0
      %686 = vmatprep.subr.bf16.mxu0 0
      %687 = vmatpush2.bf16.msra.mxu0 0
      %688 = vmatprep.mubr.bf16.mxu0 0
      %689 = vmatmul.mubr.bf16.gmra.mxu0 %v654
      %v690 = vpop.f32.mrf.mxu0
      %v691 = vadd.f32 0.0, %v690
      %v692 = vpop.f32.mrf.mxu0
      %v693 = vpop.f32.mrf.mxu0
      %v694 = vpop.f32.mrf.mxu0
      %695 = vdwg.mxu0
      %v696 = vadd.f32 %v366, %v691
      %v697 = vmul.f32 %v441, %v640
      %v698 = vmul.f32 %v448, %v650
      %v699 = vadd.f32 %v697, %v698
      %v700 = vadd.f32 %v699, 0.01
      %v701 = vmul.f32 %v646, %v457
      %v702 = vmul.f32 %v464, %v696
      %v703 = vadd.f32 %v701, %v702
      %v704 = vmul.f32 %v700, %v650
      %v705 = vsub.f32 %v703, %v704
      %v706 = vsub.f32 %v705, %v700
      %vm707 = vcmp.gt.f32.partialorder %v706, 0.0
      %v708 = vsel %vm707, 1, 0
      %v709 = vcvt.s32.f32 %v708
      %v710 = vadd.f32 %v651, %v709
      %v711 = vmul.f32 %v710, 0.2
      %v712 = vpack.c.bf16 %v711, %v711
      %v721 = vunpack.c.l.b16 %v146
      %v722 = vunpack.c.l.b16 %v147
      %v723 = vunpack.c.l.b16 %v148
      %v724 = vunpack.c.l.b16 %v149
      %v725 = vunpack.c.l.b16 %v150
      %v726 = vunpack.c.l.b16 %v151
      %v727 = vunpack.c.l.b16 %v152
      %v728 = vunpack.c.l.b16 %v153
      %v729 = vpack.c.b16 %v722, %v721
      %v730 = vpack.c.b16 %v724, %v723
      %v731 = vpack.c.b16 %v726, %v725
      %v732 = vpack.c.b16 %v728, %v727
      %v738 = vsel %vm392, %v712, 0
      %740 = vmatprep.subr.bf16.mxu0 0
      %741 = vmatpush1.bf16.msra.mxu0 0
      %742 = vmatprep.subr.bf16.mxu0 0
      %743 = vmatpush1.bf16.msra.mxu0 0
      %744 = vmatprep.subr.bf16.mxu0 0
      %745 = vmatpush1.bf16.msra.mxu0 0
      %746 = vmatprep.subr.bf16.mxu0 0
      %747 = vmatpush1.bf16.msra.mxu0 0
      %748 = vmatprep.subr.bf16.mxu0 0
      %749 = vmatpush1.bf16.msra.mxu0 %v732
      %750 = vmatprep.subr.bf16.mxu0 0
      %751 = vmatpush1.bf16.msra.mxu0 %v731
      %752 = vmatprep.subr.bf16.mxu0 0
      %753 = vmatpush1.bf16.msra.mxu0 %v730
      %754 = vmatprep.subr.bf16.mxu0 0
      %755 = vmatpush1.bf16.msra.mxu0 %v729
      %756 = vmatprep.subr.bf16.mxu0 0
      %757 = vmatpush2.bf16.msra.mxu0 0
      %758 = vmatprep.subr.bf16.mxu0 0
      %759 = vmatpush2.bf16.msra.mxu0 0
      %760 = vmatprep.subr.bf16.mxu0 0
      %761 = vmatpush2.bf16.msra.mxu0 0
      %762 = vmatprep.subr.bf16.mxu0 0
      %763 = vmatpush2.bf16.msra.mxu0 0
      %764 = vmatprep.subr.bf16.mxu0 0
      %765 = vmatpush2.bf16.msra.mxu0 0
      %766 = vmatprep.subr.bf16.mxu0 0
      %767 = vmatpush2.bf16.msra.mxu0 0
      %768 = vmatprep.subr.bf16.mxu0 0
      %769 = vmatpush2.bf16.msra.mxu0 0
      %770 = vmatprep.subr.bf16.mxu0 0
      %771 = vmatpush2.bf16.msra.mxu0 0
      %772 = vmatprep.mubr.bf16.mxu0 0
      %773 = vmatmul.mubr.bf16.gmra.mxu0 %v738
      %v774 = vpop.f32.mrf.mxu0
      %v775 = vadd.f32 0.0, %v774
      %v776 = vpop.f32.mrf.mxu0
      %v777 = vpop.f32.mrf.mxu0
      %v778 = vpop.f32.mrf.mxu0
      %779 = vdwg.mxu0
      %s780 = smul.u32 %s166, 8
      %s781 = scalar_lea.vmem [#allocation2], %s780
      %782 = vst [vmem:[%s781] sm:$0xff] %v775
      %v791 = vunpack.c.l.b16 %v154
      %v792 = vunpack.c.l.b16 %v155
      %v793 = vunpack.c.l.b16 %v156
      %v794 = vunpack.c.l.b16 %v157
      %v795 = vunpack.c.l.b16 %v158
      %v796 = vunpack.c.l.b16 %v159
      %v797 = vunpack.c.l.b16 %v160
      %v798 = vunpack.c.l.b16 %v161
      %v799 = vpack.c.b16 %v792, %v791
      %v800 = vpack.c.b16 %v794, %v793
      %v801 = vpack.c.b16 %v796, %v795
      %v802 = vpack.c.b16 %v798, %v797
      %807 = vmatprep.subr.bf16.mxu0 0
      %808 = vmatpush1.bf16.msra.mxu0 0
      %809 = vmatprep.subr.bf16.mxu0 0
      %810 = vmatpush1.bf16.msra.mxu0 0
      %811 = vmatprep.subr.bf16.mxu0 0
      %812 = vmatpush1.bf16.msra.mxu0 0
      %813 = vmatprep.subr.bf16.mxu0 0
      %814 = vmatpush1.bf16.msra.mxu0 0
      %815 = vmatprep.subr.bf16.mxu0 0
      %816 = vmatpush1.bf16.msra.mxu0 %v802
      %817 = vmatprep.subr.bf16.mxu0 0
      %818 = vmatpush1.bf16.msra.mxu0 %v801
      %819 = vmatprep.subr.bf16.mxu0 0
      %820 = vmatpush1.bf16.msra.mxu0 %v800
      %821 = vmatprep.subr.bf16.mxu0 0
      %822 = vmatpush1.bf16.msra.mxu0 %v799
      %823 = vmatprep.subr.bf16.mxu0 0
      %824 = vmatpush2.bf16.msra.mxu0 0
      %825 = vmatprep.subr.bf16.mxu0 0
      %826 = vmatpush2.bf16.msra.mxu0 0
      %827 = vmatprep.subr.bf16.mxu0 0
      %828 = vmatpush2.bf16.msra.mxu0 0
      %829 = vmatprep.subr.bf16.mxu0 0
      %830 = vmatpush2.bf16.msra.mxu0 0
      %831 = vmatprep.subr.bf16.mxu0 0
      %832 = vmatpush2.bf16.msra.mxu0 0
      %833 = vmatprep.subr.bf16.mxu0 0
      %834 = vmatpush2.bf16.msra.mxu0 0
      %835 = vmatprep.subr.bf16.mxu0 0
      %836 = vmatpush2.bf16.msra.mxu0 0
      %837 = vmatprep.subr.bf16.mxu0 0
      %838 = vmatpush2.bf16.msra.mxu0 0
      %839 = vmatprep.mubr.bf16.mxu0 0
      %840 = vmatmul.mubr.bf16.gmra.mxu0 %v738
      %v841 = vpop.f32.mrf.mxu0
      %v842 = vadd.f32 0.0, %v841
      %v843 = vpop.f32.mrf.mxu0
      %v844 = vpop.f32.mrf.mxu0
      %v845 = vpop.f32.mrf.mxu0
      %846 = vdwg.mxu0
      %s847 = smul.u32 %s180, 8
      %s848 = scalar_lea.vmem [#allocation3], %s847
      %849 = vst [vmem:[%s848] sm:$0xff] %v842
    $region74: #{tpu_custom_call.1} parent=1 // loop_footer
      %s170 = sadd.s32 1, %s166
    $region75: #{tpu_custom_call.1} parent=1 // loop_footer_branch
      %165 = sbr.rel target = $region71
    $region76: #{tpu_custom_call.1} parent=1 // loop_exit
      _
    %v850 = vlaneseq
    %v851 = vand.u32 %v850, 127
    %vm852 = vcmp.lt.s32.totalorder %v851, 8
    loop: start=0, step=1, limit=4
    $region77: #{tpu_custom_call.1} parent=1 // loop_pre_header
      _
    $region78: #{tpu_custom_call.1} parent=1 // loop_header
      %s854 = sphi 0, %s858
      %p855 = scmp.ge.s32.totalorder %s854, 4
      %v859 = vphi 0.0, %v887
    $region79: #{tpu_custom_call.1} parent=1 // loop_header_branch
      %857 = sbr.rel (%p855) target = $region83
    $region80: #{tpu_custom_call.1} parent=1 // loop_body
      %s860 = smul.u32 %s854, 8
      %s861 = scalar_lea.vmem [#allocation2], %s860
      %v862 = vld [vmem:[%s861] sm:$0xff]
      %s863 = scalar_lea.vmem [#allocation3], %s860
      %v864 = vld [vmem:[%s863] sm:$0xff]
      %v865 = vadd.f32 %v862, %v864
      %v867 = vlaneseq
      %v868 = vshrl.u32 %v867, 7
      %v869 = vsub.s32 0, %v868
      %v870 = vrot.slane %v162, %v869
      %v872 = vadd.f32 %v865, %v870
      %v874 = vlaneseq
      %v875 = vshrl.u32 %v874, 7
      %v876 = vsub.s32 0, %v875
      %v877 = vrot.slane %v163, %v876
      %v879 = vmul.f32 %v859, %v877
      %v881 = vlaneseq
      %v882 = vshrl.u32 %v881, 7
      %v883 = vsub.s32 0, %v882
      %v884 = vrot.slane %v164, %v883
      %v886 = vmul.f32 %v884, %v872
      %v887 = vadd.f32 %v879, %v886
      %v888 = vsel %vm852, %v887, -1e+30
      %889 = vmax.xlane.f32.xlu0 %v888
      %v890 = vpop.xlane.xlu0 %889
      %v891 = vsub.f32 %v888, %v890
      %v892 = vmul.f32 %v891, 1.442695
      %v893 = vpow.pop %v892
      %894 = vadd.xlane.f32.xlu0 %v893
      %v895 = vpop.xlane.xlu0 %894
      %v896 = vlog2.pop %v895
      %v897 = vmul.f32 %v896, 0.6931472
      %v898 = vadd.f32 %v890, %v897
      %v899 = vsub.f32 %v887, %v898
      %s900 = scalar_lea.vmem [#allocation15], %s860
      %901 = vst [vmem:[%s900] sm:$0xff] %v899
    $region81: #{tpu_custom_call.1} parent=1 // loop_footer
      %s858 = sadd.s32 1, %s854
    $region82: #{tpu_custom_call.1} parent=1 // loop_footer_branch
      %853 = sbr.rel target = $region78
    $region83: #{tpu_custom_call.1} parent=1 // loop_exit
      _
    // Predicated region
    $region84: #{tpu_custom_call.1} parent=1 // pred_check
      _
    $region85: #{tpu_custom_call.1} parent=1 // pred_check_branch
      %903 = sbr.rel (0) target = $region87
    $region86: #{tpu_custom_call.1} parent=1 // pred_region
      %s905 = ssub.s32 512, 512
      %906 = vsyncadd [#allocation6], %s905
      %s907 = sshll.u32 [#allocation15], 4
      %s908 = int_to_ptr.vmem [resolvable:$true] %s907
      %913 = dma.vmem_to_hbm [thread:$0]  %s908, 512, %s11, [#allocation6], 128, 128, 8
    $region87: #{tpu_custom_call.1} parent=1 // pred_fallthru
      _
    // Predicated region
    $region88: #{tpu_custom_call.1} parent=1 // pred_check
      _
    $region89: #{tpu_custom_call.1} parent=1 // pred_check_branch
      %915 = sbr.rel (0) target = $region91
    $region90: #{tpu_custom_call.1} parent=1 // pred_region
      %916 = dma.done [#allocation6], 512
    $region91: #{tpu_custom_call.1} parent=1 // pred_fallthru
      _
    %917 = vsyncpa [#allocation5], 1
    %918 = vsyncpa [#allocation8], 1
    %919 = vsyncpa [#allocation11], 1
    %920 = vsyncpa [#allocation14], 1
    %921 = vsyncpa [#allocation6], 1

</llo_original>
